<compile_context>
chip_gen: v7x
topology: tpu7x:2x2x1
jax: 0.10.0
libtpu: 0.0.40
codegen_flags: <defaults>
</compile_context>

<pallas_src>
import functools

import jax
import jax.numpy as jnp
from jax.experimental import pallas as pl
from jax.experimental.pallas import tpu as pltpu

_EPS = 1e-5
_TILE_M = 512                      # row tile (pixels) for the 1x1-conv kernels
_VMEM_LIMIT = 32 * 1024 * 1024     # conservative: fits v5e/v6e/v7x scoped VMEM


# ----------------------------------------------------------------------------
# Small helpers
# ----------------------------------------------------------------------------
def _round_up(x, m):
    return (x + m - 1) // m * m


def _choose_tile(m, cap=_TILE_M):
    return min(cap, _round_up(m, 8))


def _pad_rows(a, m_pad):
    if a.shape[0] == m_pad:
        return a
    pad = [(0, m_pad - a.shape[0])] + [(0, 0)] * (a.ndim - 1)
    return jnp.pad(a, pad)


def _pad_mat(w, rows, cols):
    return jnp.pad(w, ((0, rows - w.shape[0]), (0, cols - w.shape[1])))


def _pad_vec(v, n, fill):
    return jnp.pad(v, (0, n - v.shape[0]), constant_values=fill)


def _cparams(*sems):
    return pltpu.CompilerParams(dimension_semantics=sems,
                                vmem_limit_bytes=_VMEM_LIMIT)


# ----------------------------------------------------------------------------
# Pass 1 (1x1 conv): y = x @ w  (bf16 inputs, f32 accumulation) plus per-tile
# per-channel sum / sum-of-squares partials for the two-pass BatchNorm.
# ----------------------------------------------------------------------------
def _mm_stats_kernel(x_ref, w_ref, y_ref, st_ref):
    y = jnp.dot(x_ref[...], w_ref[...], preferred_element_type=jnp.float32)
    y_ref[...] = y
    st_ref[0:1, :] = jnp.sum(y, axis=0, keepdims=True)
    st_ref[1:2, :] = jnp.sum(y * y, axis=0, keepdims=True)


def _matmul_stats(x2d, w, *, tm):
    mp, k = x2d.shape
    c = w.shape[1]
    nt = mp // tm
    return pl.pallas_call(
        _mm_stats_kernel,
        out_shape=(jax.ShapeDtypeStruct((mp, c), jnp.float32),
                   jax.ShapeDtypeStruct((nt, 2, c), jnp.float32)),
        grid=(nt,),
        in_specs=[pl.BlockSpec((tm, k), lambda i: (i, 0)),
                  pl.BlockSpec((k, c), lambda i: (0, 0))],
        out_specs=(pl.BlockSpec((tm, c), lambda i: (i, 0)),
                   pl.BlockSpec((None, 2, c), lambda i: (i, 0, 0))),
        compiler_params=_cparams("parallel"),
    )(x2d, w)


# ----------------------------------------------------------------------------
# Pass 1 (3x3 conv, stride s, pad 1) without a materialized im2col tensor.
# Grid = (N, Ho, 3): the three kh taps are a reduction axis accumulating into
# a VMEM scratch; the three kw taps are shifted in-kernel matmuls.
# ----------------------------------------------------------------------------
def _conv3x3_stats_kernel(hp_ref, w_ref, y_ref, st_ref, acc_ref, *,
                          stride, w_full, wo):
    dh = pl.program_id(2)

    @pl.when(dh == 0)
    def _init():
        acc_ref[...] = jnp.zeros_like(acc_ref)

    acc = acc_ref[...]
    for dw in range(3):
        xs = hp_ref[dw:dw + w_full, :]                  # (w_full, C) bf16
        wk = w_ref[dh * 3 + dw]                         # (C, C)     bf16
        acc = acc + jnp.dot(xs, wk, preferred_element_type=jnp.float32)
    acc_ref[...] = acc

    @pl.when(dh == pl.num_programs(2) - 1)
    def _finish():
        if stride == 1:
            yv = acc
        else:                                           # decimate output cols
            yv = acc_ref[pl.ds(0, wo, stride), :]
        y_ref[...] = yv
        st_ref[0:1, :] = jnp.sum(yv, axis=0, keepdims=True)
        st_ref[1:2, :] = jnp.sum(yv * yv, axis=0, keepdims=True)


def _conv3x3_stats(hp, w9, *, stride, ho, wo):
    n, _, wp2, c = hp.shape
    w_full = wp2 - 2
    kern = functools.partial(_conv3x3_stats_kernel, stride=stride,
                             w_full=w_full, wo=wo)
    return pl.pallas_call(
        kern,
        out_shape=(jax.ShapeDtypeStruct((n, ho, wo, c), jnp.float32),
                   jax.ShapeDtypeStruct((n, ho, 2, c), jnp.float32)),
        grid=(n, ho, 3),
        in_specs=[
            pl.BlockSpec((None, None, wp2, c),
                         lambda b, i, dh: (b, i * stride + dh, 0, 0)),
            pl.BlockSpec((9, c, c), lambda b, i, dh: (0, 0, 0)),
        ],
        out_specs=(
            pl.BlockSpec((None, None, wo, c), lambda b, i, dh: (b, i, 0, 0)),
            pl.BlockSpec((None, None, 2, c), lambda b, i, dh: (b, i, 0, 0)),
        ),
        scratch_shapes=[pltpu.VMEM((w_full, c), jnp.float32)],
        compiler_params=_cparams("parallel", "parallel", "arbitrary"),
    )(hp, w9)


# ----------------------------------------------------------------------------
# Pass 2: fused per-channel normalize+affine (+ residual) (+ ReLU), row-tiled.
# scale/shift are precomputed so the per-element work is a single FMA.
# ----------------------------------------------------------------------------
def _bn_act_kernel(y_ref, sc_ref, sh_ref, o_ref, *, relu):
    out = y_ref[...] * sc_ref[...] + sh_ref[...]
    if relu:
        out = jnp.maximum(out, 0.0)
    o_ref[...] = out.astype(o_ref.dtype)


def _bn_add_relu_kernel(y_ref, sc_ref, sh_ref, r_ref, o_ref):
    out = y_ref[...] * sc_ref[...] + sh_ref[...] + r_ref[...]
    o_ref[...] = jnp.maximum(out, 0.0).astype(o_ref.dtype)


def _bn_ds_add_relu_kernel(y_ref, sc_ref, sh_ref, yd_ref, scd_ref, shd_ref,
                           o_ref):
    main = y_ref[...] * sc_ref[...] + sh_ref[...]
    resid = yd_ref[...] * scd_ref[...] + shd_ref[...]
    o_ref[...] = jnp.maximum(main + resid, 0.0).astype(o_ref.dtype)


def _run_rowwise(kernel, inputs, row_tiled, out_dtype, *, tm):
    mp, c = inputs[0].shape
    nt = mp // tm
    in_specs = [
        pl.BlockSpec((tm, c), lambda i: (i, 0)) if tiled
        else pl.BlockSpec((1, c), lambda i: (0, 0))
        for tiled in row_tiled
    ]
    return pl.pallas_call(
        kernel,
        out_shape=jax.ShapeDtypeStruct((mp, c), out_dtype),
        grid=(nt,),
        in_specs=in_specs,
        out_specs=pl.BlockSpec((tm, c), lambda i: (i, 0)),
        compiler_params=_cparams("parallel"),
    )(*inputs)


def _bn_act(y, scale, shift, *, relu, out_dtype, tm):
    return _run_rowwise(functools.partial(_bn_act_kernel, relu=relu),
                        [y, scale, shift], [True, False, False],
                        out_dtype, tm=tm)


def _finalize_stats(st, count, gamma_p, beta_p, eps=_EPS):
    """Reduce per-tile (sum, sumsq) partials -> per-channel scale/shift."""
    st = st.reshape(-1, 2, st.shape[-1]).sum(axis=0)     # (2, C) f32
    mean = st[0] / count
    var = jnp.maximum(st[1] / count - mean * mean, 0.0)
    scale = gamma_p * jax.lax.rsqrt(var + eps)
    shift = beta_p - mean * scale
    return scale.reshape(1, -1), shift.reshape(1, -1)


# ----------------------------------------------------------------------------
# Parameter init (deterministic, synthetic)
# ----------------------------------------------------------------------------
def init_bottleneck_params(key, in_places, places, expansion=4,
                           downsampling=False):
    keys = jax.random.split(key, 12)

    def conv_w(k, cout, cin, kh, kw):
        fan_in = cin * kh * kw
        return jax.random.normal(k, (cout, cin, kh, kw), jnp.float32) / jnp.sqrt(
            jnp.float32(fan_in))

    def bn(kg, kb, c):
        g = 1.0 + 0.1 * jax.random.normal(kg, (c,), jnp.float32)
        b = 0.1 * jax.random.normal(kb, (c,), jnp.float32)
        return g, b

    out_c = places * expansion
    p = {}
    p["w1"] = conv_w(keys[0], places, in_places, 1, 1)
    p["g1"], p["b1"] = bn(keys[1], keys[2], places)
    p["w2"] = conv_w(keys[3], places, places, 3, 3)
    p["g2"], p["b2"] = bn(keys[4], keys[5], places)
    p["w3"] = conv_w(keys[6], out_c, places, 1, 1)
    p["g3"], p["b3"] = bn(keys[7], keys[8], out_c)
    if downsampling:
        p["wd"] = conv_w(keys[9], out_c, in_places, 1, 1)
        p["gd"], p["bd"] = bn(keys[10], keys[11], out_c)
    return p


# ----------------------------------------------------------------------------
# Bottleneck forward (Pallas) — input/output in PyTorch NCHW layout.
# ----------------------------------------------------------------------------
def bottleneck_forward(x_nchw, params, stride=1, downsampling=False,
                       expansion=4):
    n, cin, h, w = x_nchw.shape
    places = params["w1"].shape[0]
    out_c = places * expansion

    cin_p = _round_up(cin, 128)
    pla_p = _round_up(places, 128)
    out_p = _round_up(out_c, 128)

    x_nhwc = jnp.transpose(x_nchw, (0, 2, 3, 1)).astype(jnp.float32)
    x_cp = jnp.pad(x_nhwc, ((0, 0), (0, 0), (0, 0), (0, cin_p - cin)))

    # ---- conv1 (1x1) + BN + ReLU -------------------------------------------
    m1 = n * h * w
    tm1 = _choose_tile(m1)
    m1p = _round_up(m1, tm1)
    x2d = _pad_rows(x_cp.reshape(m1, cin_p), m1p).astype(jnp.bfloat16)
    w1 = _pad_mat(params["w1"][:, :, 0, 0].T, cin_p, pla_p).astype(jnp.bfloat16)
    y1, st1 = _matmul_stats(x2d, w1, tm=tm1)
    sc1, sh1 = _finalize_stats(st1, m1, _pad_vec(params["g1"], pla_p, 1.0),
                               _pad_vec(params["b1"], pla_p, 0.0))
    h1 = _bn_act(y1, sc1, sh1, relu=True, out_dtype=jnp.bfloat16, tm=tm1)
    h1 = h1[:m1].reshape(n, h, w, pla_p)

    # ---- conv2 (3x3, stride, pad=1) + BN + ReLU ----------------------------
    ho = (h + 2 - 3) // stride + 1
    wo = (w + 2 - 3) // stride + 1
    hp = jnp.pad(h1, ((0, 0), (1, 1), (1, 1), (0, 0)))
    w2 = jnp.transpose(params["w2"], (2, 3, 1, 0))           # (3,3,in,out)
    w2 = jnp.pad(w2, ((0, 0), (0, 0),
                      (0, pla_p - places), (0, pla_p - places)))
    w2 = w2.reshape(9, pla_p, pla_p).astype(jnp.bfloat16)
    y2, st2 = _conv3x3_stats(hp, w2, stride=stride, ho=ho, wo=wo)
    m2 = n * ho * wo
    sc2, sh2 = _finalize_stats(st2, m2, _pad_vec(params["g2"], pla_p, 1.0),
                               _pad_vec(params["b2"], pla_p, 0.0))
    tm2 = _choose_tile(m2)
    m2p = _round_up(m2, tm2)
    y2_2d = _pad_rows(y2.reshape(m2, pla_p), m2p)
    h2 = _bn_act(y2_2d, sc2, sh2, relu=True, out_dtype=jnp.bfloat16, tm=tm2)
    # re-zero any padded rows so they do not pollute conv3's batch statistics
    h2 = _pad_rows(h2[:m2], m2p)

    # ---- conv3 (1x1) + BN --------------------------------------------------
    w3 = _pad_mat(params["w3"][:, :, 0, 0].T, pla_p, out_p).astype(jnp.bfloat16)
    y3, st3 = _matmul_stats(h2, w3, tm=tm2)
    sc3, sh3 = _finalize_stats(st3, m2, _pad_vec(params["g3"], out_p, 1.0),
                               _pad_vec(params["b3"], out_p, 0.0))

    # ---- residual path + fused final normalize / add / ReLU ---------------
    if downsampling:
        # TODO(synk): the strided residual gather could be folded into the
        # downsample matmul's BlockSpec index_map instead of an XLA slice.
        xs = x_cp[:, ::stride, ::stride, :]
        xs2d = _pad_rows(xs.reshape(m2, cin_p), m2p).astype(jnp.bfloat16)
        wd = _pad_mat(params["wd"][:, :, 0, 0].T, cin_p, out_p).astype(
            jnp.bfloat16)
        yd, std_ = _matmul_stats(xs2d, wd, tm=tm2)
        scd, shd = _finalize_stats(std_, m2, _pad_vec(params["gd"], out_p, 1.0),
                                   _pad_vec(params["bd"], out_p, 0.0))
        out2d = _run_rowwise(_bn_ds_add_relu_kernel,
                             [y3, sc3, sh3, yd, scd, shd],
                             [True, False, False, True, False, False],
                             jnp.float32, tm=tm2)
    else:
        # identity skip (requires cin == out_c and stride == 1)
        resid = _pad_rows(x_cp.reshape(m1, cin_p), m2p)
        out2d = _run_rowwise(_bn_add_relu_kernel,
                             [y3, sc3, sh3, resid],
                             [True, False, False, True],
                             jnp.float32, tm=tm2)

    out = out2d[:m2, :out_c].reshape(n, ho, wo, out_c)
    return jnp.transpose(out, (0, 3, 1, 2))                 # -> NCHW


# ----------------------------------------------------------------------------
# Pure-JAX reference (for correctness check)
# ----------------------------------------------------------------------------
def _ref_conv(x, w, stride=1, padding=0):
    return jax.lax.conv_general_dilated(
        x, w, window_strides=(stride, stride),
        padding=((padding, padding), (padding, padding)),
        dimension_numbers=("NCHW", "OIHW", "NCHW"),
        precision=jax.lax.Precision.HIGHEST)


def _ref_bn(x, g, b, eps=_EPS):
    mean = jnp.mean(x, axis=(0, 2, 3), keepdims=True)
    var = jnp.mean((x - mean) ** 2, axis=(0, 2, 3), keepdims=True)
    return (x - mean) * jax.lax.rsqrt(var + eps) * g.reshape(1, -1, 1, 1) + \
        b.reshape(1, -1, 1, 1)


def bottleneck_reference(x, p, stride=1, downsampling=False):
    out = jnp.maximum(_ref_bn(_ref_conv(x, p["w1"]), p["g1"], p["b1"]), 0.0)
    out = jnp.maximum(_ref_bn(_ref_conv(out, p["w2"], stride, 1),
                              p["g2"], p["b2"]), 0.0)
    out = _ref_bn(_ref_conv(out, p["w3"]), p["g3"], p["b3"])
    residual = x
    if downsampling:
        residual = _ref_bn(_ref_conv(x, p["wd"], stride), p["gd"], p["bd"])
    return jnp.maximum(out + residual, 0.0)


# ----------------------------------------------------------------------------
if __name__ == "__main__":
    key = jax.random.PRNGKey(0)

    # Case A: downsampling block (in_places=16, places=8, stride=2)
    kx, kp = jax.random.split(key)
    x_a = jax.random.normal(kx, (2, 16, 8, 8), jnp.float32)
    params_a = init_bottleneck_params(kp, in_places=16, places=8,
                                      expansion=4, downsampling=True)
    fwd_a = jax.jit(functools.partial(bottleneck_forward, stride=2,
                                      downsampling=True))
    out_a = jax.block_until_ready(fwd_a(x_a, params_a))
    ref_a = bottleneck_reference(x_a, params_a, stride=2, downsampling=True)
    assert out_a.shape == (2, 32, 4, 4), out_a.shape
    # bf16 MXU inputs (f32 accumulation) leave a few 1e-3 of relative error vs
    # the f32-HIGHEST reference; 3e-2 still flags any structural mistake.
    assert jnp.allclose(out_a, ref_a, atol=3e-2, rtol=3e-2), "case A mismatch"

    # Case B: identity block (in_places=32, places=8, stride=1)
    kx2, kp2 = jax.random.split(kp)
    x_b = jax.random.normal(kx2, (2, 32, 8, 8), jnp.float32)
    params_b = init_bottleneck_params(kp2, in_places=32, places=8,
                                      expansion=4, downsampling=False)
    fwd_b = jax.jit(functools.partial(bottleneck_forward, stride=1,
                                      downsampling=False))
    out_b = jax.block_until_ready(fwd_b(x_b, params_b))
    ref_b = bottleneck_reference(x_b, params_b, stride=1, downsampling=False)
    assert out_b.shape == (2, 32, 8, 8), out_b.shape
    assert jnp.allclose(out_b, ref_b, atol=3e-2, rtol=3e-2), "case B mismatch"

    print("KERNEL_OK")
</pallas_src>

<mosaic_0001>
module attributes {stable_mosaic.version = 11 : i64} {
  func.func @_mm_stats_kernel(%arg0: i32, %arg1: memref<128x128xbf16, #tpu.memory_space<vmem>>, %arg2: memref<128x128xbf16, #tpu.memory_space<vmem>>, %arg3: memref<128x128xf32, #tpu.memory_space<vmem>>, %arg4: memref<1x2x128xf32, #tpu.memory_space<vmem>>) attributes {dimension_semantics = [#tpu.dimension_semantics<parallel>], iteration_bounds = array<i64: 1>, scalar_prefetch = 0 : i64, scratch_operands = 0 : i64, tpu.core_type = #tpu.core_type<tc>, window_params = [{transform_indices = @transform_0, window_bounds = array<i64: 128, 128>}, {pipeline_mode = #tpu.pipeline_mode<synchronous>, transform_indices = @transform_1, window_bounds = array<i64: 128, 128>}, {transform_indices = @transform_2, window_bounds = array<i64: 128, 128>}, {transform_indices = @transform_3, window_bounds = array<i64: 1, 2, 128>}]} {
    %c0 = arith.constant 0 : index
    %c0_0 = arith.constant 0 : index
    %0 = vector.load %arg1[%c0, %c0_0] : memref<128x128xbf16, #tpu.memory_space<vmem>>, vector<128x128xbf16>
    %c0_1 = arith.constant 0 : index
    %c0_2 = arith.constant 0 : index
    %1 = vector.load %arg2[%c0_1, %c0_2] : memref<128x128xbf16, #tpu.memory_space<vmem>>, vector<128x128xbf16>
    %cst = arith.constant dense<0.000000e+00> : vector<128x128xf32>
    %2 = tpu.matmul %0, %1, %cst {dimension_numbers = #tpu.dot_dimension_numbers<[1], [0], [0], [1], [0, 0, 1, 1], [], []>} : vector<128x128xbf16>, vector<128x128xbf16>, vector<128x128xf32> -> vector<128x128xf32>
    %c0_3 = arith.constant 0 : index
    %c0_4 = arith.constant 0 : index
    %3 = vector.load %arg3[%c0_3, %c0_4] : memref<128x128xf32, #tpu.memory_space<vmem>>, vector<128x128xf32>
    tpu.vector_store %arg3[%c0_3, %c0_4], %2 {strides = array<i32>} : memref<128x128xf32, #tpu.memory_space<vmem>>, vector<128x128xf32>,
    %cst_5 = arith.constant dense<0.000000e+00> : vector<128xf32>
    %4 = vector.multi_reduction <add>, %2, %cst_5 [0] : vector<128x128xf32> to vector<128xf32>
    %5 = vector.shape_cast %4 : vector<128xf32> to vector<1x128xf32>
    %c0_6 = arith.constant 0 : index
    %c0_7 = arith.constant 0 : index
    %c0_8 = arith.constant 0 : index
    %6 = vector.load %arg4[%c0_6, %c0_7, %c0_8] : memref<1x2x128xf32, #tpu.memory_space<vmem>>, vector<1x1x128xf32>
    %7 = vector.shape_cast %6 : vector<1x1x128xf32> to vector<1x128xf32>
    %8 = vector.shape_cast %5 : vector<1x128xf32> to vector<1x1x128xf32>
    tpu.vector_store %arg4[%c0_6, %c0_7, %c0_8], %8 {strides = array<i32>} : memref<1x2x128xf32, #tpu.memory_space<vmem>>, vector<1x1x128xf32>,
    %9 = arith.mulf %2, %2 : vector<128x128xf32>
    %cst_9 = arith.constant dense<0.000000e+00> : vector<128xf32>
    %10 = vector.multi_reduction <add>, %9, %cst_9 [0] : vector<128x128xf32> to vector<128xf32>
    %11 = vector.shape_cast %10 : vector<128xf32> to vector<1x128xf32>
    %c0_10 = arith.constant 0 : index
    %c1 = arith.constant 1 : index
    %c0_11 = arith.constant 0 : index
    %12 = vector.load %arg4[%c0_10, %c1, %c0_11] : memref<1x2x128xf32, #tpu.memory_space<vmem>>, vector<1x1x128xf32>
    %13 = vector.shape_cast %12 : vector<1x1x128xf32> to vector<1x128xf32>
    %14 = vector.shape_cast %11 : vector<1x128xf32> to vector<1x1x128xf32>
    tpu.vector_store %arg4[%c0_10, %c1, %c0_11], %14 {strides = array<i32>} : memref<1x2x128xf32, #tpu.memory_space<vmem>>, vector<1x1x128xf32>,
    return
  }
  func.func @transform_0(%arg0: i32) -> (i32, i32) {
    %c0_i32 = arith.constant 0 : i32
    %c0_i32_0 = arith.constant 0 : i32
    return %arg0, %c0_i32 : i32, i32
  }
  func.func @transform_1(%arg0: i32) -> (i32, i32) {
    %c0_i32 = arith.constant 0 : i32
    %c0_i32_0 = arith.constant 0 : i32
    %c0_i32_1 = arith.constant 0 : i32
    return %c0_i32, %c0_i32_0 : i32, i32
  }
  func.func @transform_2(%arg0: i32) -> (i32, i32) {
    %c0_i32 = arith.constant 0 : i32
    %c0_i32_0 = arith.constant 0 : i32
    return %arg0, %c0_i32 : i32, i32
  }
  func.func @transform_3(%arg0: i32) -> (i32, i32, i32) {
    %c0_i32 = arith.constant 0 : i32
    %c0_i32_0 = arith.constant 0 : i32
    %c0_i32_1 = arith.constant 0 : i32
    return %arg0, %c0_i32, %c0_i32_0 : i32, i32, i32
  }
}

module attributes {stable_mosaic.version = 11 : i64} {
  func.func @_bn_act_kernel(%arg0: i32, %arg1: memref<128x128xf32, #tpu.memory_space<vmem>>, %arg2: memref<1x128xf32, #tpu.memory_space<vmem>>, %arg3: memref<1x128xf32, #tpu.memory_space<vmem>>, %arg4: memref<128x128xbf16, #tpu.memory_space<vmem>>) attributes {dimension_semantics = [#tpu.dimension_semantics<parallel>], iteration_bounds = array<i64: 1>, scalar_prefetch = 0 : i64, scratch_operands = 0 : i64, tpu.core_type = #tpu.core_type<tc>, window_params = [{transform_indices = @transform_0, window_bounds = array<i64: 128, 128>}, {pipeline_mode = #tpu.pipeline_mode<synchronous>, transform_indices = @transform_1, window_bounds = array<i64: 1, 128>}, {pipeline_mode = #tpu.pipeline_mode<synchronous>, transform_indices = @transform_2, window_bounds = array<i64: 1, 128>}, {transform_indices = @transform_3, window_bounds = array<i64: 128, 128>}]} {
    %c0 = arith.constant 0 : index
    %c0_0 = arith.constant 0 : index
    %0 = vector.load %arg1[%c0, %c0_0] : memref<128x128xf32, #tpu.memory_space<vmem>>, vector<128x128xf32>
    %c0_1 = arith.constant 0 : index
    %c0_2 = arith.constant 0 : index
    %1 = vector.load %arg2[%c0_1, %c0_2] : memref<1x128xf32, #tpu.memory_space<vmem>>, vector<1x128xf32>
    %2 = vector.broadcast %1 : vector<1x128xf32> to vector<128x128xf32>
    %3 = arith.mulf %0, %2 : vector<128x128xf32>
    %c0_3 = arith.constant 0 : index
    %c0_4 = arith.constant 0 : index
    %4 = vector.load %arg3[%c0_3, %c0_4] : memref<1x128xf32, #tpu.memory_space<vmem>>, vector<1x128xf32>
    %5 = vector.broadcast %4 : vector<1x128xf32> to vector<128x128xf32>
    %6 = arith.addf %3, %5 : vector<128x128xf32>
    %cst = arith.constant 0.000000e+00 : f32
    %7 = vector.broadcast %cst : f32 to vector<128x128xf32>
    %8 = arith.maximumf %6, %7 : vector<128x128xf32>
    %9 = arith.truncf %8 : vector<128x128xf32> to vector<128x128xbf16>
    %c0_5 = arith.constant 0 : index
    %c0_6 = arith.constant 0 : index
    %10 = vector.load %arg4[%c0_5, %c0_6] : memref<128x128xbf16, #tpu.memory_space<vmem>>, vector<128x128xbf16>
    tpu.vector_store %arg4[%c0_5, %c0_6], %9 {strides = array<i32>} : memref<128x128xbf16, #tpu.memory_space<vmem>>, vector<128x128xbf16>,
    return
  }
  func.func @transform_0(%arg0: i32) -> (i32, i32) {
    %c0_i32 = arith.constant 0 : i32
    %c0_i32_0 = arith.constant 0 : i32
    return %arg0, %c0_i32 : i32, i32
  }
  func.func @transform_1(%arg0: i32) -> (i32, i32) {
    %c0_i32 = arith.constant 0 : i32
    %c0_i32_0 = arith.constant 0 : i32
    %c0_i32_1 = arith.constant 0 : i32
    return %c0_i32, %c0_i32_0 : i32, i32
  }
  func.func @transform_2(%arg0: i32) -> (i32, i32) {
    %c0_i32 = arith.constant 0 : i32
    %c0_i32_0 = arith.constant 0 : i32
    %c0_i32_1 = arith.constant 0 : i32
    return %c0_i32, %c0_i32_0 : i32, i32
  }
  func.func @transform_3(%arg0: i32) -> (i32, i32) {
    %c0_i32 = arith.constant 0 : i32
    %c0_i32_0 = arith.constant 0 : i32
    return %arg0, %c0_i32 : i32, i32
  }
}

module attributes {stable_mosaic.version = 11 : i64} {
  func.func @_conv3x3_stats_kernel(%arg0: i32, %arg1: i32, %arg2: i32, %arg3: memref<1x1x10x128xbf16, #tpu.memory_space<vmem>>, %arg4: memref<9x128x128xbf16, #tpu.memory_space<vmem>>, %arg5: memref<1x1x4x128xf32, #tpu.memory_space<vmem>>, %arg6: memref<1x1x2x128xf32, #tpu.memory_space<vmem>>, %arg7: memref<8x128xf32, #tpu.memory_space<vmem>>) attributes {dimension_semantics = [#tpu.dimension_semantics<parallel>, #tpu.dimension_semantics<parallel>, #tpu.dimension_semantics<arbitrary>], iteration_bounds = array<i64: 2, 4, 3>, scalar_prefetch = 0 : i64, scratch_operands = 1 : i64, tpu.core_type = #tpu.core_type<tc>, window_params = [{transform_indices = @transform_0, window_bounds = array<i64: 1, 1, 10, 128>}, {pipeline_mode = #tpu.pipeline_mode<synchronous>, transform_indices = @transform_1, window_bounds = array<i64: 9, 128, 128>}, {transform_indices = @transform_2, window_bounds = array<i64: 1, 1, 4, 128>}, {transform_indices = @transform_3, window_bounds = array<i64: 1, 1, 2, 128>}]} {
    %c0_i32 = arith.constant 0 : i32
    %0 = arith.cmpi eq, %arg2, %c0_i32 : i32
    %1 = arith.extui %0 : i1 to i32
    %c0_i32_0 = arith.constant 0 : i32
    %2 = arith.cmpi ne, %1, %c0_i32_0 : i32
    scf.if %2 {
      %cst_27 = arith.constant 0.000000e+00 : f32
      %35 = vector.broadcast %cst_27 : f32 to vector<8x128xf32>
      %c0_28 = arith.constant 0 : index
      %c0_29 = arith.constant 0 : index
      %36 = vector.load %arg7[%c0_28, %c0_29] : memref<8x128xf32, #tpu.memory_space<vmem>>, vector<8x128xf32>
      tpu.vector_store %arg7[%c0_28, %c0_29], %35 {strides = array<i32>} : memref<8x128xf32, #tpu.memory_space<vmem>>, vector<8x128xf32>,
    } else {
    }
    %c0 = arith.constant 0 : index
    %c0_1 = arith.constant 0 : index
    %3 = vector.load %arg7[%c0, %c0_1] : memref<8x128xf32, #tpu.memory_space<vmem>>, vector<8x128xf32>
    %c0_2 = arith.constant 0 : index
    %c0_3 = arith.constant 0 : index
    %c0_4 = arith.constant 0 : index
    %c0_5 = arith.constant 0 : index
    %4 = vector.load %arg3[%c0_2, %c0_3, %c0_4, %c0_5] : memref<1x1x10x128xbf16, #tpu.memory_space<vmem>>, vector<1x1x8x128xbf16>
    %5 = vector.shape_cast %4 : vector<1x1x8x128xbf16> to vector<8x128xbf16>
    %c3_i32 = arith.constant 3 : i32
    %6 = arith.muli %arg2, %c3_i32 : i32
    %c0_i32_6 = arith.constant 0 : i32
    %7 = arith.addi %6, %c0_i32_6 : i32
    %8 = arith.index_cast %7 : i32 to index
    %c0_7 = arith.constant 0 : index
    %c0_8 = arith.constant 0 : index
    %9 = vector.load %arg4[%8, %c0_7, %c0_8] : memref<9x128x128xbf16, #tpu.memory_space<vmem>>, vector<1x128x128xbf16>
    %10 = vector.shape_cast %9 : vector<1x128x128xbf16> to vector<128x128xbf16>
    %cst = arith.constant dense<0.000000e+00> : vector<8x128xf32>
    %11 = tpu.matmul %5, %10, %cst {dimension_numbers = #tpu.dot_dimension_numbers<[1], [0], [0], [1], [0, 0, 1, 1], [], []>} : vector<8x128xbf16>, vector<128x128xbf16>, vector<8x128xf32> -> vector<8x128xf32>
    %12 = arith.addf %3, %11 : vector<8x128xf32>
    %c0_9 = arith.constant 0 : index
    %c0_10 = arith.constant 0 : index
    %c1 = arith.constant 1 : index
    %c0_11 = arith.constant 0 : index
    %13 = vector.load %arg3[%c0_9, %c0_10, %c1, %c0_11] : memref<1x1x10x128xbf16, #tpu.memory_space<vmem>>, vector<1x1x8x128xbf16>
    %14 = vector.shape_cast %13 : vector<1x1x8x128xbf16> to vector<8x128xbf16>
    %c3_i32_12 = arith.constant 3 : i32
    %15 = arith.muli %arg2, %c3_i32_12 : i32
    %c1_i32 = arith.constant 1 : i32
    %16 = arith.addi %15, %c1_i32 : i32
    %17 = arith.index_cast %16 : i32 to index
    %c0_13 = arith.constant 0 : index
    %c0_14 = arith.constant 0 : index
    %18 = vector.load %arg4[%17, %c0_13, %c0_14] : memref<9x128x128xbf16, #tpu.memory_space<vmem>>, vector<1x128x128xbf16>
    %19 = vector.shape_cast %18 : vector<1x128x128xbf16> to vector<128x128xbf16>
    %cst_15 = arith.constant dense<0.000000e+00> : vector<8x128xf32>
    %20 = tpu.matmul %14, %19, %cst_15 {dimension_numbers = #tpu.dot_dimension_numbers<[1], [0], [0], [1], [0, 0, 1, 1], [], []>} : vector<8x128xbf16>, vector<128x128xbf16>, vector<8x128xf32> -> vector<8x128xf32>
    %21 = arith.addf %12, %20 : vector<8x128xf32>
    %c0_16 = arith.constant 0 : index
    %c0_17 = arith.constant 0 : index
    %c2 = arith.constant 2 : index
    %c0_18 = arith.constant 0 : index
    %22 = vector.load %arg3[%c0_16, %c0_17, %c2, %c0_18] : memref<1x1x10x128xbf16, #tpu.memory_space<vmem>>, vector<1x1x8x128xbf16>
    %23 = vector.shape_cast %22 : vector<1x1x8x128xbf16> to vector<8x128xbf16>
    %c3_i32_19 = arith.constant 3 : i32
    %24 = arith.muli %arg2, %c3_i32_19 : i32
    %c2_i32 = arith.constant 2 : i32
    %25 = arith.addi %24, %c2_i32 : i32
    %26 = arith.index_cast %25 : i32 to index
    %c0_20 = arith.constant 0 : index
    %c0_21 = arith.constant 0 : index
    %27 = vector.load %arg4[%26, %c0_20, %c0_21] : memref<9x128x128xbf16, #tpu.memory_space<vmem>>, vector<1x128x128xbf16>
    %28 = vector.shape_cast %27 : vector<1x128x128xbf16> to vector<128x128xbf16>
    %cst_22 = arith.constant dense<0.000000e+00> : vector<8x128xf32>
    %29 = tpu.matmul %23, %28, %cst_22 {dimension_numbers = #tpu.dot_dimension_numbers<[1], [0], [0], [1], [0, 0, 1, 1], [], []>} : vector<8x128xbf16>, vector<128x128xbf16>, vector<8x128xf32> -> vector<8x128xf32>
    %30 = arith.addf %21, %29 : vector<8x128xf32>
    %c0_23 = arith.constant 0 : index
    %c0_24 = arith.constant 0 : index
    %31 = vector.load %arg7[%c0_23, %c0_24] : memref<8x128xf32, #tpu.memory_space<vmem>>, vector<8x128xf32>
    tpu.vector_store %arg7[%c0_23, %c0_24], %30 {strides = array<i32>} : memref<8x128xf32, #tpu.memory_space<vmem>>, vector<8x128xf32>,
    %c2_i32_25 = arith.constant 2 : i32
    %32 = arith.cmpi eq, %arg2, %c2_i32_25 : i32
    %33 = arith.extui %32 : i1 to i32
    %c0_i32_26 = arith.constant 0 : i32
    %34 = arith.cmpi ne, %33, %c0_i32_26 : i32
    scf.if %34 {
      %c0_27 = arith.constant 0 : index
      %c0_28 = arith.constant 0 : index
      %35 = tpu.strided_load %arg7[%c0_27, %c0_28] {strides = array<i32: 2, 1>} : memref<8x128xf32, #tpu.memory_space<vmem>>, vector<4x128xf32>
      %c0_29 = arith.constant 0 : index
      %c0_30 = arith.constant 0 : index
      %c0_31 = arith.constant 0 : index
      %c0_32 = arith.constant 0 : index
      %36 = vector.load %arg5[%c0_29, %c0_30, %c0_31, %c0_32] : memref<1x1x4x128xf32, #tpu.memory_space<vmem>>, vector<1x1x4x128xf32>
      %37 = vector.shape_cast %36 : vector<1x1x4x128xf32> to vector<4x128xf32>
      %38 = vector.shape_cast %35 : vector<4x128xf32> to vector<1x1x4x128xf32>
      tpu.vector_store %arg5[%c0_29, %c0_30, %c0_31, %c0_32], %38 {strides = array<i32>} : memref<1x1x4x128xf32, #tpu.memory_space<vmem>>, vector<1x1x4x128xf32>,
      %cst_33 = arith.constant dense<0.000000e+00> : vector<128xf32>
      %39 = vector.multi_reduction <add>, %35, %cst_33 [0] : vector<4x128xf32> to vector<128xf32>
      %40 = vector.shape_cast %39 : vector<128xf32> to vector<1x128xf32>
      %c0_34 = arith.constant 0 : index
      %c0_35 = arith.constant 0 : index
      %c0_36 = arith.constant 0 : index
      %c0_37 = arith.constant 0 : index
      %41 = vector.load %arg6[%c0_34, %c0_35, %c0_36, %c0_37] : memref<1x1x2x128xf32, #tpu.memory_space<vmem>>, vector<1x1x1x128xf32>
      %42 = vector.shape_cast %41 : vector<1x1x1x128xf32> to vector<1x128xf32>
      %43 = vector.shape_cast %40 : vector<1x128xf32> to vector<1x1x1x128xf32>
      tpu.vector_store %arg6[%c0_34, %c0_35, %c0_36, %c0_37], %43 {strides = array<i32>} : memref<1x1x2x128xf32, #tpu.memory_space<vmem>>, vector<1x1x1x128xf32>,
      %44 = arith.mulf %35, %35 : vector<4x128xf32>
      %cst_38 = arith.constant dense<0.000000e+00> : vector<128xf32>
      %45 = vector.multi_reduction <add>, %44, %cst_38 [0] : vector<4x128xf32> to vector<128xf32>
      %46 = vector.shape_cast %45 : vector<128xf32> to vector<1x128xf32>
      %c0_39 = arith.constant 0 : index
      %c0_40 = arith.constant 0 : index
      %c1_41 = arith.constant 1 : index
      %c0_42 = arith.constant 0 : index
      %47 = vector.load %arg6[%c0_39, %c0_40, %c1_41, %c0_42] : memref<1x1x2x128xf32, #tpu.memory_space<vmem>>, vector<1x1x1x128xf32>
      %48 = vector.shape_cast %47 : vector<1x1x1x128xf32> to vector<1x128xf32>
      %49 = vector.shape_cast %46 : vector<1x128xf32> to vector<1x1x1x128xf32>
      tpu.vector_store %arg6[%c0_39, %c0_40, %c1_41, %c0_42], %49 {strides = array<i32>} : memref<1x1x2x128xf32, #tpu.memory_space<vmem>>, vector<1x1x1x128xf32>,
    } else {
    }
    return
  }
  func.func @transform_0(%arg0: i32, %arg1: i32, %arg2: i32) -> (i32, i32, i32, i32) {
    %c2_i32 = arith.constant 2 : i32
    %0 = arith.muli %arg1, %c2_i32 : i32
    %1 = arith.addi %0, %arg2 : i32
    %c0_i32 = arith.constant 0 : i32
    %c0_i32_0 = arith.constant 0 : i32
    %c0_i32_1 = arith.constant 0 : i32
    return %arg0, %1, %c0_i32, %c0_i32_0 : i32, i32, i32, i32
  }
  func.func @transform_1(%arg0: i32, %arg1: i32, %arg2: i32) -> (i32, i32, i32) {
    %c0_i32 = arith.constant 0 : i32
    %c0_i32_0 = arith.constant 0 : i32
    %c0_i32_1 = arith.constant 0 : i32
    %c0_i32_2 = arith.constant 0 : i32
    return %c0_i32, %c0_i32_0, %c0_i32_1 : i32, i32, i32
  }
  func.func @transform_2(%arg0: i32, %arg1: i32, %arg2: i32) -> (i32, i32, i32, i32) {
    %c0_i32 = arith.constant 0 : i32
    %c0_i32_0 = arith.constant 0 : i32
    %c0_i32_1 = arith.constant 0 : i32
    return %arg0, %arg1, %c0_i32, %c0_i32_0 : i32, i32, i32, i32
  }
  func.func @transform_3(%arg0: i32, %arg1: i32, %arg2: i32) -> (i32, i32, i32, i32) {
    %c0_i32 = arith.constant 0 : i32
    %c0_i32_0 = arith.constant 0 : i32
    %c0_i32_1 = arith.constant 0 : i32
    return %arg0, %arg1, %c0_i32, %c0_i32_0 : i32, i32, i32, i32
  }
}

module attributes {stable_mosaic.version = 11 : i64} {
  func.func @_bn_act_kernel(%arg0: i32, %arg1: memref<32x128xf32, #tpu.memory_space<vmem>>, %arg2: memref<1x128xf32, #tpu.memory_space<vmem>>, %arg3: memref<1x128xf32, #tpu.memory_space<vmem>>, %arg4: memref<32x128xbf16, #tpu.memory_space<vmem>>) attributes {dimension_semantics = [#tpu.dimension_semantics<parallel>], iteration_bounds = array<i64: 1>, scalar_prefetch = 0 : i64, scratch_operands = 0 : i64, tpu.core_type = #tpu.core_type<tc>, window_params = [{transform_indices = @transform_0, window_bounds = array<i64: 32, 128>}, {pipeline_mode = #tpu.pipeline_mode<synchronous>, transform_indices = @transform_1, window_bounds = array<i64: 1, 128>}, {pipeline_mode = #tpu.pipeline_mode<synchronous>, transform_indices = @transform_2, window_bounds = array<i64: 1, 128>}, {transform_indices = @transform_3, window_bounds = array<i64: 32, 128>}]} {
    %c0 = arith.constant 0 : index
    %c0_0 = arith.constant 0 : index
    %0 = vector.load %arg1[%c0, %c0_0] : memref<32x128xf32, #tpu.memory_space<vmem>>, vector<32x128xf32>
    %c0_1 = arith.constant 0 : index
    %c0_2 = arith.constant 0 : index
    %1 = vector.load %arg2[%c0_1, %c0_2] : memref<1x128xf32, #tpu.memory_space<vmem>>, vector<1x128xf32>
    %2 = vector.broadcast %1 : vector<1x128xf32> to vector<32x128xf32>
    %3 = arith.mulf %0, %2 : vector<32x128xf32>
    %c0_3 = arith.constant 0 : index
    %c0_4 = arith.constant 0 : index
    %4 = vector.load %arg3[%c0_3, %c0_4] : memref<1x128xf32, #tpu.memory_space<vmem>>, vector<1x128xf32>
    %5 = vector.broadcast %4 : vector<1x128xf32> to vector<32x128xf32>
    %6 = arith.addf %3, %5 : vector<32x128xf32>
    %cst = arith.constant 0.000000e+00 : f32
    %7 = vector.broadcast %cst : f32 to vector<32x128xf32>
    %8 = arith.maximumf %6, %7 : vector<32x128xf32>
    %9 = arith.truncf %8 : vector<32x128xf32> to vector<32x128xbf16>
    %c0_5 = arith.constant 0 : index
    %c0_6 = arith.constant 0 : index
    %10 = vector.load %arg4[%c0_5, %c0_6] : memref<32x128xbf16, #tpu.memory_space<vmem>>, vector<32x128xbf16>
    tpu.vector_store %arg4[%c0_5, %c0_6], %9 {strides = array<i32>} : memref<32x128xbf16, #tpu.memory_space<vmem>>, vector<32x128xbf16>,
    return
  }
  func.func @transform_0(%arg0: i32) -> (i32, i32) {
    %c0_i32 = arith.constant 0 : i32
    %c0_i32_0 = arith.constant 0 : i32
    return %arg0, %c0_i32 : i32, i32
  }
  func.func @transform_1(%arg0: i32) -> (i32, i32) {
    %c0_i32 = arith.constant 0 : i32
    %c0_i32_0 = arith.constant 0 : i32
    %c0_i32_1 = arith.constant 0 : i32
    return %c0_i32, %c0_i32_0 : i32, i32
  }
  func.func @transform_2(%arg0: i32) -> (i32, i32) {
    %c0_i32 = arith.constant 0 : i32
    %c0_i32_0 = arith.constant 0 : i32
    %c0_i32_1 = arith.constant 0 : i32
    return %c0_i32, %c0_i32_0 : i32, i32
  }
  func.func @transform_3(%arg0: i32) -> (i32, i32) {
    %c0_i32 = arith.constant 0 : i32
    %c0_i32_0 = arith.constant 0 : i32
    return %arg0, %c0_i32 : i32, i32
  }
}

module attributes {stable_mosaic.version = 11 : i64} {
  func.func @_mm_stats_kernel(%arg0: i32, %arg1: memref<32x128xbf16, #tpu.memory_space<vmem>>, %arg2: memref<128x128xbf16, #tpu.memory_space<vmem>>, %arg3: memref<32x128xf32, #tpu.memory_space<vmem>>, %arg4: memref<1x2x128xf32, #tpu.memory_space<vmem>>) attributes {dimension_semantics = [#tpu.dimension_semantics<parallel>], iteration_bounds = array<i64: 1>, scalar_prefetch = 0 : i64, scratch_operands = 0 : i64, tpu.core_type = #tpu.core_type<tc>, window_params = [{transform_indices = @transform_0, window_bounds = array<i64: 32, 128>}, {pipeline_mode = #tpu.pipeline_mode<synchronous>, transform_indices = @transform_1, window_bounds = array<i64: 128, 128>}, {transform_indices = @transform_2, window_bounds = array<i64: 32, 128>}, {transform_indices = @transform_3, window_bounds = array<i64: 1, 2, 128>}]} {
    %c0 = arith.constant 0 : index
    %c0_0 = arith.constant 0 : index
    %0 = vector.load %arg1[%c0, %c0_0] : memref<32x128xbf16, #tpu.memory_space<vmem>>, vector<32x128xbf16>
    %c0_1 = arith.constant 0 : index
    %c0_2 = arith.constant 0 : index
    %1 = vector.load %arg2[%c0_1, %c0_2] : memref<128x128xbf16, #tpu.memory_space<vmem>>, vector<128x128xbf16>
    %cst = arith.constant dense<0.000000e+00> : vector<32x128xf32>
    %2 = tpu.matmul %0, %1, %cst {dimension_numbers = #tpu.dot_dimension_numbers<[1], [0], [0], [1], [0, 0, 1, 1], [], []>} : vector<32x128xbf16>, vector<128x128xbf16>, vector<32x128xf32> -> vector<32x128xf32>
    %c0_3 = arith.constant 0 : index
    %c0_4 = arith.constant 0 : index
    %3 = vector.load %arg3[%c0_3, %c0_4] : memref<32x128xf32, #tpu.memory_space<vmem>>, vector<32x128xf32>
    tpu.vector_store %arg3[%c0_3, %c0_4], %2 {strides = array<i32>} : memref<32x128xf32, #tpu.memory_space<vmem>>, vector<32x128xf32>,
    %cst_5 = arith.constant dense<0.000000e+00> : vector<128xf32>
    %4 = vector.multi_reduction <add>, %2, %cst_5 [0] : vector<32x128xf32> to vector<128xf32>
    %5 = vector.shape_cast %4 : vector<128xf32> to vector<1x128xf32>
    %c0_6 = arith.constant 0 : index
    %c0_7 = arith.constant 0 : index
    %c0_8 = arith.constant 0 : index
    %6 = vector.load %arg4[%c0_6, %c0_7, %c0_8] : memref<1x2x128xf32, #tpu.memory_space<vmem>>, vector<1x1x128xf32>
    %7 = vector.shape_cast %6 : vector<1x1x128xf32> to vector<1x128xf32>
    %8 = vector.shape_cast %5 : vector<1x128xf32> to vector<1x1x128xf32>
    tpu.vector_store %arg4[%c0_6, %c0_7, %c0_8], %8 {strides = array<i32>} : memref<1x2x128xf32, #tpu.memory_space<vmem>>, vector<1x1x128xf32>,
    %9 = arith.mulf %2, %2 : vector<32x128xf32>
    %cst_9 = arith.constant dense<0.000000e+00> : vector<128xf32>
    %10 = vector.multi_reduction <add>, %9, %cst_9 [0] : vector<32x128xf32> to vector<128xf32>
    %11 = vector.shape_cast %10 : vector<128xf32> to vector<1x128xf32>
    %c0_10 = arith.constant 0 : index
    %c1 = arith.constant 1 : index
    %c0_11 = arith.constant 0 : index
    %12 = vector.load %arg4[%c0_10, %c1, %c0_11] : memref<1x2x128xf32, #tpu.memory_space<vmem>>, vector<1x1x128xf32>
    %13 = vector.shape_cast %12 : vector<1x1x128xf32> to vector<1x128xf32>
    %14 = vector.shape_cast %11 : vector<1x128xf32> to vector<1x1x128xf32>
    tpu.vector_store %arg4[%c0_10, %c1, %c0_11], %14 {strides = array<i32>} : memref<1x2x128xf32, #tpu.memory_space<vmem>>, vector<1x1x128xf32>,
    return
  }
  func.func @transform_0(%arg0: i32) -> (i32, i32) {
    %c0_i32 = arith.constant 0 : i32
    %c0_i32_0 = arith.constant 0 : i32
    return %arg0, %c0_i32 : i32, i32
  }
  func.func @transform_1(%arg0: i32) -> (i32, i32) {
    %c0_i32 = arith.constant 0 : i32
    %c0_i32_0 = arith.constant 0 : i32
    %c0_i32_1 = arith.constant 0 : i32
    return %c0_i32, %c0_i32_0 : i32, i32
  }
  func.func @transform_2(%arg0: i32) -> (i32, i32) {
    %c0_i32 = arith.constant 0 : i32
    %c0_i32_0 = arith.constant 0 : i32
    return %arg0, %c0_i32 : i32, i32
  }
  func.func @transform_3(%arg0: i32) -> (i32, i32, i32) {
    %c0_i32 = arith.constant 0 : i32
    %c0_i32_0 = arith.constant 0 : i32
    %c0_i32_1 = arith.constant 0 : i32
    return %arg0, %c0_i32, %c0_i32_0 : i32, i32, i32
  }
}

module attributes {stable_mosaic.version = 11 : i64} {
  func.func @_bn_ds_add_relu_kernel(%arg0: i32, %arg1: memref<32x128xf32, #tpu.memory_space<vmem>>, %arg2: memref<1x128xf32, #tpu.memory_space<vmem>>, %arg3: memref<1x128xf32, #tpu.memory_space<vmem>>, %arg4: memref<32x128xf32, #tpu.memory_space<vmem>>, %arg5: memref<1x128xf32, #tpu.memory_space<vmem>>, %arg6: memref<1x128xf32, #tpu.memory_space<vmem>>, %arg7: memref<32x128xf32, #tpu.memory_space<vmem>>) attributes {dimension_semantics = [#tpu.dimension_semantics<parallel>], iteration_bounds = array<i64: 1>, scalar_prefetch = 0 : i64, scratch_operands = 0 : i64, tpu.core_type = #tpu.core_type<tc>, window_params = [{transform_indices = @transform_0, window_bounds = array<i64: 32, 128>}, {pipeline_mode = #tpu.pipeline_mode<synchronous>, transform_indices = @transform_1, window_bounds = array<i64: 1, 128>}, {pipeline_mode = #tpu.pipeline_mode<synchronous>, transform_indices = @transform_2, window_bounds = array<i64: 1, 128>}, {transform_indices = @transform_3, window_bounds = array<i64: 32, 128>}, {pipeline_mode = #tpu.pipeline_mode<synchronous>, transform_indices = @transform_4, window_bounds = array<i64: 1, 128>}, {pipeline_mode = #tpu.pipeline_mode<synchronous>, transform_indices = @transform_5, window_bounds = array<i64: 1, 128>}, {transform_indices = @transform_6, window_bounds = array<i64: 32, 128>}]} {
    %c0 = arith.constant 0 : index
    %c0_0 = arith.constant 0 : index
    %0 = vector.load %arg1[%c0, %c0_0] : memref<32x128xf32, #tpu.memory_space<vmem>>, vector<32x128xf32>
    %c0_1 = arith.constant 0 : index
    %c0_2 = arith.constant 0 : index
    %1 = vector.load %arg2[%c0_1, %c0_2] : memref<1x128xf32, #tpu.memory_space<vmem>>, vector<1x128xf32>
    %2 = vector.broadcast %1 : vector<1x128xf32> to vector<32x128xf32>
    %3 = arith.mulf %0, %2 : vector<32x128xf32>
    %c0_3 = arith.constant 0 : index
    %c0_4 = arith.constant 0 : index
    %4 = vector.load %arg3[%c0_3, %c0_4] : memref<1x128xf32, #tpu.memory_space<vmem>>, vector<1x128xf32>
    %5 = vector.broadcast %4 : vector<1x128xf32> to vector<32x128xf32>
    %6 = arith.addf %3, %5 : vector<32x128xf32>
    %c0_5 = arith.constant 0 : index
    %c0_6 = arith.constant 0 : index
    %7 = vector.load %arg4[%c0_5, %c0_6] : memref<32x128xf32, #tpu.memory_space<vmem>>, vector<32x128xf32>
    %c0_7 = arith.constant 0 : index
    %c0_8 = arith.constant 0 : index
    %8 = vector.load %arg5[%c0_7, %c0_8] : memref<1x128xf32, #tpu.memory_space<vmem>>, vector<1x128xf32>
    %9 = vector.broadcast %8 : vector<1x128xf32> to vector<32x128xf32>
    %10 = arith.mulf %7, %9 : vector<32x128xf32>
    %c0_9 = arith.constant 0 : index
    %c0_10 = arith.constant 0 : index
    %11 = vector.load %arg6[%c0_9, %c0_10] : memref<1x128xf32, #tpu.memory_space<vmem>>, vector<1x128xf32>
    %12 = vector.broadcast %11 : vector<1x128xf32> to vector<32x128xf32>
    %13 = arith.addf %10, %12 : vector<32x128xf32>
    %14 = arith.addf %6, %13 : vector<32x128xf32>
    %cst = arith.constant 0.000000e+00 : f32
    %15 = vector.broadcast %cst : f32 to vector<32x128xf32>
    %16 = arith.maximumf %14, %15 : vector<32x128xf32>
    %c0_11 = arith.constant 0 : index
    %c0_12 = arith.constant 0 : index
    %17 = vector.load %arg7[%c0_11, %c0_12] : memref<32x128xf32, #tpu.memory_space<vmem>>, vector<32x128xf32>
    tpu.vector_store %arg7[%c0_11, %c0_12], %16 {strides = array<i32>} : memref<32x128xf32, #tpu.memory_space<vmem>>, vector<32x128xf32>,
    return
  }
  func.func @transform_0(%arg0: i32) -> (i32, i32) {
    %c0_i32 = arith.constant 0 : i32
    %c0_i32_0 = arith.constant 0 : i32
    return %arg0, %c0_i32 : i32, i32
  }
  func.func @transform_1(%arg0: i32) -> (i32, i32) {
    %c0_i32 = arith.constant 0 : i32
    %c0_i32_0 = arith.constant 0 : i32
    %c0_i32_1 = arith.constant 0 : i32
    return %c0_i32, %c0_i32_0 : i32, i32
  }
  func.func @transform_2(%arg0: i32) -> (i32, i32) {
    %c0_i32 = arith.constant 0 : i32
    %c0_i32_0 = arith.constant 0 : i32
    %c0_i32_1 = arith.constant 0 : i32
    return %c0_i32, %c0_i32_0 : i32, i32
  }
  func.func @transform_3(%arg0: i32) -> (i32, i32) {
    %c0_i32 = arith.constant 0 : i32
    %c0_i32_0 = arith.constant 0 : i32
    return %arg0, %c0_i32 : i32, i32
  }
  func.func @transform_4(%arg0: i32) -> (i32, i32) {
    %c0_i32 = arith.constant 0 : i32
    %c0_i32_0 = arith.constant 0 : i32
    %c0_i32_1 = arith.constant 0 : i32
    return %c0_i32, %c0_i32_0 : i32, i32
  }
  func.func @transform_5(%arg0: i32) -> (i32, i32) {
    %c0_i32 = arith.constant 0 : i32
    %c0_i32_0 = arith.constant 0 : i32
    %c0_i32_1 = arith.constant 0 : i32
    return %c0_i32, %c0_i32_0 : i32, i32
  }
  func.func @transform_6(%arg0: i32) -> (i32, i32) {
    %c0_i32 = arith.constant 0 : i32
    %c0_i32_0 = arith.constant 0 : i32
    return %arg0, %c0_i32 : i32, i32
  }
}

</mosaic_0001>

<llo_original>
// kernel: bottleneck_forward.7
$region0: #{bottleneck_forward.7}
  #allocation0 [shape = 'u32[]', space=smem, size = 0x4, offset = 0x4, fixed_abs, tag = 'smem constant byte address 0x4 - core index']
  #allocation1 [shape = 'u32[144,128]{1,0:T(1,128)}', space=vmem, size = 0x12000, scoped, tag = 'internal scratch']
  %s0 = inlined_call_operand.vmem [shape: bf16[128,128], index: 0, kind: input, shape index: {}]
  %s1 = inlined_call_operand.vmem [shape: bf16[128,128], index: 1, kind: input, shape index: {}]
  %s2 = inlined_call_operand.vmem [shape: f32[128,128], index: 2, kind: output, shape index: {0}]
  %s3 = inlined_call_operand.vmem [shape: f32[1,2,128], index: 3, kind: output, shape index: {1}]
  %4 = xla_tuple %s2, %s3
  %s5 = sld [smem:[#allocation0]]
  $region26: #{bottleneck_forward.7} parent=0
    _
  %s7 = ssub.s32 1, %s5
  %s8 = scalar_select 0, %s7, %s5
  // Predicated region
  $region2: #{bottleneck_forward.7} parent=0 // pred_check
    _
  $region3: #{bottleneck_forward.7} parent=0 // pred_check_branch
    %10 = sbr.rel (0) target = $region5
  $region4: #{bottleneck_forward.7} parent=0 // pred_region
    _
  $region5: #{bottleneck_forward.7} parent=0 // pred_fallthru
    _
  // Predicated region
  $region6: #{bottleneck_forward.7} parent=0 // pred_check
    _
  $region7: #{bottleneck_forward.7} parent=0 // pred_check_branch
    %12 = sbr.rel (0) target = $region9
  $region8: #{bottleneck_forward.7} parent=0 // pred_region
    _
  $region9: #{bottleneck_forward.7} parent=0 // pred_fallthru
    _
  %v14 = vld [vmem:[%s0] sm:$0xf]
  %v15 = vld [vmem:[%s0 + $0x4] sm:$0xf]
  %v16 = vld [vmem:[%s0 + $0x8] sm:$0xf]
  %v17 = vld [vmem:[%s0 + $0xc] sm:$0xf]
  %v18 = vld [vmem:[%s0 + $0x10] sm:$0xf]
  %v19 = vld [vmem:[%s0 + $0x14] sm:$0xf]
  %v20 = vld [vmem:[%s0 + $0x18] sm:$0xf]
  %v21 = vld [vmem:[%s0 + $0x1c] sm:$0xf]
  %v22 = vld [vmem:[%s0 + $0x20] sm:$0xf]
  %v23 = vld [vmem:[%s0 + $0x24] sm:$0xf]
  %v24 = vld [vmem:[%s0 + $0x28] sm:$0xf]
  %v25 = vld [vmem:[%s0 + $0x2c] sm:$0xf]
  %v26 = vld [vmem:[%s0 + $0x30] sm:$0xf]
  %v27 = vld [vmem:[%s0 + $0x34] sm:$0xf]
  %v28 = vld [vmem:[%s0 + $0x38] sm:$0xf]
  %v29 = vld [vmem:[%s0 + $0x3c] sm:$0xf]
  %v30 = vld [vmem:[%s1] sm:$0xf]
  %v31 = vld [vmem:[%s1 + $0x4] sm:$0xf]
  %v32 = vld [vmem:[%s1 + $0x8] sm:$0xf]
  %v33 = vld [vmem:[%s1 + $0xc] sm:$0xf]
  %v34 = vld [vmem:[%s1 + $0x10] sm:$0xf]
  %v35 = vld [vmem:[%s1 + $0x14] sm:$0xf]
  %v36 = vld [vmem:[%s1 + $0x18] sm:$0xf]
  %v37 = vld [vmem:[%s1 + $0x1c] sm:$0xf]
  %v38 = vld [vmem:[%s1 + $0x20] sm:$0xf]
  %v39 = vld [vmem:[%s1 + $0x24] sm:$0xf]
  %v40 = vld [vmem:[%s1 + $0x28] sm:$0xf]
  %v41 = vld [vmem:[%s1 + $0x2c] sm:$0xf]
  %v42 = vld [vmem:[%s1 + $0x30] sm:$0xf]
  %v43 = vld [vmem:[%s1 + $0x34] sm:$0xf]
  %v44 = vld [vmem:[%s1 + $0x38] sm:$0xf]
  %v45 = vld [vmem:[%s1 + $0x3c] sm:$0xf]
  %v62 = vunpack.c.l.b16 %v14
  %v63 = vunpack.c.l.b16 %v15
  %v64 = vunpack.c.l.b16 %v16
  %v65 = vunpack.c.l.b16 %v17
  %v66 = vunpack.c.l.b16 %v18
  %v67 = vunpack.c.l.b16 %v19
  %v68 = vunpack.c.l.b16 %v20
  %v69 = vunpack.c.l.b16 %v21
  %v70 = vunpack.c.l.b16 %v22
  %v71 = vunpack.c.l.b16 %v23
  %v72 = vunpack.c.l.b16 %v24
  %v73 = vunpack.c.l.b16 %v25
  %v74 = vunpack.c.l.b16 %v26
  %v75 = vunpack.c.l.b16 %v27
  %v76 = vunpack.c.l.b16 %v28
  %v77 = vunpack.c.l.b16 %v29
  %v78 = vpack.c.b16 %v63, %v62
  %v79 = vpack.c.b16 %v65, %v64
  %v80 = vpack.c.b16 %v67, %v66
  %v81 = vpack.c.b16 %v69, %v68
  %v82 = vpack.c.b16 %v71, %v70
  %v83 = vpack.c.b16 %v73, %v72
  %v84 = vpack.c.b16 %v75, %v74
  %v85 = vpack.c.b16 %v77, %v76
  %v110 = vunpack.c.l.b16 %v30
  %v111 = vunpack.c.l.b16 %v31
  %v112 = vunpack.c.l.b16 %v32
  %v113 = vunpack.c.l.b16 %v33
  %v114 = vunpack.c.l.b16 %v34
  %v115 = vunpack.c.l.b16 %v35
  %v116 = vunpack.c.l.b16 %v36
  %v117 = vunpack.c.l.b16 %v37
  %v118 = vunpack.c.l.b16 %v38
  %v119 = vunpack.c.l.b16 %v39
  %v120 = vunpack.c.l.b16 %v40
  %v121 = vunpack.c.l.b16 %v41
  %v122 = vunpack.c.l.b16 %v42
  %v123 = vunpack.c.l.b16 %v43
  %v124 = vunpack.c.l.b16 %v44
  %v125 = vunpack.c.l.b16 %v45
  %v126 = vpack.c.b16 %v111, %v110
  %v127 = vpack.c.b16 %v113, %v112
  %v128 = vpack.c.b16 %v115, %v114
  %v129 = vpack.c.b16 %v117, %v116
  %v130 = vpack.c.b16 %v119, %v118
  %v131 = vpack.c.b16 %v121, %v120
  %v132 = vpack.c.b16 %v123, %v122
  %v133 = vpack.c.b16 %v125, %v124
  %142 = vmatprep.subr.bf16.mxu0 0
  %143 = vmatpush1.bf16.msra.mxu0 %v126
  %144 = vmatprep.subr.bf16.mxu0 0
  %145 = vmatpush1.bf16.msra.mxu0 %v127
  %146 = vmatprep.subr.bf16.mxu0 0
  %147 = vmatpush1.bf16.msra.mxu0 %v128
  %148 = vmatprep.subr.bf16.mxu0 0
  %149 = vmatpush1.bf16.msra.mxu0 %v129
  %150 = vmatprep.subr.bf16.mxu0 0
  %151 = vmatpush1.bf16.msra.mxu0 %v130
  %152 = vmatprep.subr.bf16.mxu0 0
  %153 = vmatpush1.bf16.msra.mxu0 %v131
  %154 = vmatprep.subr.bf16.mxu0 0
  %155 = vmatpush1.bf16.msra.mxu0 %v132
  %156 = vmatprep.subr.bf16.mxu0 0
  %157 = vmatpush1.bf16.msra.mxu0 %v133
  %158 = vmatprep.subr.bf16.mxu0 0
  %159 = vmatpush1.bf16.msra.mxu0 0
  %160 = vmatprep.subr.bf16.mxu0 0
  %161 = vmatpush1.bf16.msra.mxu0 0
  %162 = vmatprep.subr.bf16.mxu0 0
  %163 = vmatpush1.bf16.msra.mxu0 0
  %164 = vmatprep.subr.bf16.mxu0 0
  %165 = vmatpush1.bf16.msra.mxu0 0
  %166 = vmatprep.subr.bf16.mxu0 0
  %167 = vmatpush1.bf16.msra.mxu0 0
  %168 = vmatprep.subr.bf16.mxu0 0
  %169 = vmatpush1.bf16.msra.mxu0 0
  %170 = vmatprep.subr.bf16.mxu0 0
  %171 = vmatpush1.bf16.msra.mxu0 0
  %172 = vmatprep.subr.bf16.mxu0 0
  %173 = vmatpush1.bf16.msra.mxu0 0
  %174 = vmatprep.mubr.bf16.mxu0 0
  %175 = vmatmul.mubr.bf16.gmra.mrb[0].mxu0 %v78
  %v176 = vpop.f32.mrb[0].mxu0
  %v177 = vadd.f32 0.0, %v176
  %v178 = vpop.f32.mrb[0].mxu0
  %v179 = vpop.f32.mrb[0].mxu0
  %v180 = vadd.f32 0.0, %v179
  %v181 = vpop.f32.mrb[0].mxu0
  %182 = vmatprep.mubr.bf16.mxu0 0
  %183 = vmatmul.mubr.bf16.gmra.mrb[0].mxu0 %v79
  %v184 = vpop.f32.mrb[0].mxu0
  %v185 = vadd.f32 0.0, %v184
  %v186 = vpop.f32.mrb[0].mxu0
  %v187 = vpop.f32.mrb[0].mxu0
  %v188 = vadd.f32 0.0, %v187
  %v189 = vpop.f32.mrb[0].mxu0
  %190 = vmatprep.mubr.bf16.mxu0 0
  %191 = vmatmul.mubr.bf16.gmra.mrb[0].mxu0 %v80
  %v192 = vpop.f32.mrb[0].mxu0
  %v193 = vadd.f32 0.0, %v192
  %v194 = vpop.f32.mrb[0].mxu0
  %v195 = vpop.f32.mrb[0].mxu0
  %v196 = vadd.f32 0.0, %v195
  %v197 = vpop.f32.mrb[0].mxu0
  %198 = vmatprep.mubr.bf16.mxu0 0
  %199 = vmatmul.mubr.bf16.gmra.mrb[0].mxu0 %v81
  %v200 = vpop.f32.mrb[0].mxu0
  %v201 = vadd.f32 0.0, %v200
  %v202 = vpop.f32.mrb[0].mxu0
  %v203 = vpop.f32.mrb[0].mxu0
  %v204 = vadd.f32 0.0, %v203
  %v205 = vpop.f32.mrb[0].mxu0
  %206 = vmatprep.mubr.bf16.mxu0 0
  %207 = vmatmul.mubr.bf16.gmra.mrb[0].mxu0 %v82
  %v208 = vpop.f32.mrb[0].mxu0
  %v209 = vadd.f32 0.0, %v208
  %v210 = vpop.f32.mrb[0].mxu0
  %v211 = vpop.f32.mrb[0].mxu0
  %v212 = vadd.f32 0.0, %v211
  %v213 = vpop.f32.mrb[0].mxu0
  %214 = vmatprep.mubr.bf16.mxu0 0
  %215 = vmatmul.mubr.bf16.gmra.mrb[0].mxu0 %v83
  %v216 = vpop.f32.mrb[0].mxu0
  %v217 = vadd.f32 0.0, %v216
  %v218 = vpop.f32.mrb[0].mxu0
  %v219 = vpop.f32.mrb[0].mxu0
  %v220 = vadd.f32 0.0, %v219
  %v221 = vpop.f32.mrb[0].mxu0
  %222 = vmatprep.mubr.bf16.mxu0 0
  %223 = vmatmul.mubr.bf16.gmra.mrb[0].mxu0 %v84
  %v224 = vpop.f32.mrb[0].mxu0
  %v225 = vadd.f32 0.0, %v224
  %v226 = vpop.f32.mrb[0].mxu0
  %v227 = vpop.f32.mrb[0].mxu0
  %v228 = vadd.f32 0.0, %v227
  %v229 = vpop.f32.mrb[0].mxu0
  %230 = vmatprep.mubr.bf16.mxu0 0
  %231 = vmatmul.mubr.bf16.gmra.mrb[0].mxu0 %v85
  %v232 = vpop.f32.mrb[0].mxu0
  %v233 = vadd.f32 0.0, %v232
  %v234 = vpop.f32.mrb[0].mxu0
  %v235 = vpop.f32.mrb[0].mxu0
  %v236 = vadd.f32 0.0, %v235
  %v237 = vpop.f32.mrb[0].mxu0
  %238 = vdwg.mxu0
  %239 = vst [vmem:[%s2] sm:$0xff] %v177
  %240 = vst [vmem:[%s2 + $0x8] sm:$0xff] %v180
  %241 = vst [vmem:[%s2 + $0x10] sm:$0xff] %v185
  %242 = vst [vmem:[%s2 + $0x18] sm:$0xff] %v188
  %243 = vst [vmem:[%s2 + $0x20] sm:$0xff] %v193
  %244 = vst [vmem:[%s2 + $0x28] sm:$0xff] %v196
  %245 = vst [vmem:[%s2 + $0x30] sm:$0xff] %v201
  %246 = vst [vmem:[%s2 + $0x38] sm:$0xff] %v204
  %247 = vst [vmem:[%s2 + $0x40] sm:$0xff] %v209
  %248 = vst [vmem:[%s2 + $0x48] sm:$0xff] %v212
  %249 = vst [vmem:[%s2 + $0x50] sm:$0xff] %v217
  %250 = vst [vmem:[%s2 + $0x58] sm:$0xff] %v220
  %251 = vst [vmem:[%s2 + $0x60] sm:$0xff] %v225
  %252 = vst [vmem:[%s2 + $0x68] sm:$0xff] %v228
  %253 = vst [vmem:[%s2 + $0x70] sm:$0xff] %v233
  %254 = vst [vmem:[%s2 + $0x78] sm:$0xff] %v236
  %v255 = vadd.f32 %v177, %v180
  %v256 = vadd.f32 %v255, %v185
  %v257 = vadd.f32 %v256, %v188
  %v258 = vadd.f32 %v257, %v193
  %v259 = vadd.f32 %v258, %v196
  %v260 = vadd.f32 %v259, %v201
  %v261 = vadd.f32 %v260, %v204
  %v262 = vadd.f32 %v261, %v209
  %v263 = vadd.f32 %v262, %v212
  %v264 = vadd.f32 %v263, %v217
  %v265 = vadd.f32 %v264, %v220
  %v266 = vadd.f32 %v265, %v225
  %v267 = vadd.f32 %v266, %v228
  %v268 = vadd.f32 %v267, %v233
  %v269 = vadd.f32 %v268, %v236
  %v270 = vrot.slane %v269, 4
  %v271 = vadd.f32 %v269, %v270
  %v272 = vrot.slane %v271, 2
  %v273 = vadd.f32 %v271, %v272
  %v274 = vrot.slane %v273, 1
  %v275 = vadd.f32 %v273, %v274
  %276 = vst [vmem:[%s3] sm:$0x1] %v275
  %v277 = vmul.f32 %v177, %v177
  %v278 = vmul.f32 %v180, %v180
  %v279 = vmul.f32 %v185, %v185
  %v280 = vmul.f32 %v188, %v188
  %v281 = vmul.f32 %v193, %v193
  %v282 = vmul.f32 %v196, %v196
  %v283 = vmul.f32 %v201, %v201
  %v284 = vmul.f32 %v204, %v204
  %v285 = vmul.f32 %v209, %v209
  %v286 = vmul.f32 %v212, %v212
  %v287 = vmul.f32 %v217, %v217
  %v288 = vmul.f32 %v220, %v220
  %v289 = vmul.f32 %v225, %v225
  %v290 = vmul.f32 %v228, %v228
  %v291 = vmul.f32 %v233, %v233
  %v292 = vmul.f32 %v236, %v236
  %v293 = vadd.f32 %v277, %v278
  %v294 = vadd.f32 %v293, %v279
  %v295 = vadd.f32 %v294, %v280
  %v296 = vadd.f32 %v295, %v281
  %v297 = vadd.f32 %v296, %v282
  %v298 = vadd.f32 %v297, %v283
  %v299 = vadd.f32 %v298, %v284
  %v300 = vadd.f32 %v299, %v285
  %v301 = vadd.f32 %v300, %v286
  %v302 = vadd.f32 %v301, %v287
  %v303 = vadd.f32 %v302, %v288
  %v304 = vadd.f32 %v303, %v289
  %v305 = vadd.f32 %v304, %v290
  %v306 = vadd.f32 %v305, %v291
  %v307 = vadd.f32 %v306, %v292
  %v308 = vrot.slane %v307, 4
  %v309 = vadd.f32 %v307, %v308
  %v310 = vrot.slane %v309, 2
  %v311 = vadd.f32 %v309, %v310
  %v312 = vrot.slane %v311, 1
  %v313 = vadd.f32 %v311, %v312
  %314 = vst [vmem:[%s3 + $0x1] sm:$0x1] %v313
  // Predicated region
  $region10: #{bottleneck_forward.7} parent=0 // pred_check
    _
  $region11: #{bottleneck_forward.7} parent=0 // pred_check_branch
    %316 = sbr.rel (0) target = $region13
  $region12: #{bottleneck_forward.7} parent=0 // pred_region
    _
  $region13: #{bottleneck_forward.7} parent=0 // pred_fallthru
    _
  // Predicated region
  $region14: #{bottleneck_forward.7} parent=0 // pred_check
    _
  $region15: #{bottleneck_forward.7} parent=0 // pred_check_branch
    %318 = sbr.rel (0) target = $region17
  $region16: #{bottleneck_forward.7} parent=0 // pred_region
    _
  $region17: #{bottleneck_forward.7} parent=0 // pred_fallthru
    _
  // Predicated region
  $region18: #{bottleneck_forward.7} parent=0 // pred_check
    _
  $region19: #{bottleneck_forward.7} parent=0 // pred_check_branch
    %320 = sbr.rel (0) target = $region21
  $region20: #{bottleneck_forward.7} parent=0 // pred_region
    _
  $region21: #{bottleneck_forward.7} parent=0 // pred_fallthru
    _
  // Predicated region
  $region22: #{bottleneck_forward.7} parent=0 // pred_check
    _
  $region23: #{bottleneck_forward.7} parent=0 // pred_check_branch
    %322 = sbr.rel (0) target = $region25
  $region24: #{bottleneck_forward.7} parent=0 // pred_region
    _
  $region25: #{bottleneck_forward.7} parent=0 // pred_fallthru
    _

// kernel: bottleneck_forward.8
$region0: #{bottleneck_forward.8}
  #allocation0 [shape = 'u32[]', space=smem, size = 0x4, offset = 0x4, fixed_abs, tag = 'smem constant byte address 0x4 - core index']
  #allocation1 [shape = 'u32[144,128]{1,0:T(1,128)}', space=vmem, size = 0x12000, scoped, tag = 'internal scratch']
  %s0 = inlined_call_operand.vmem [shape: f32[128,128], index: 0, kind: input, shape index: {}]
  %s1 = inlined_call_operand.vmem [shape: f32[1,128], index: 1, kind: input, shape index: {}]
  %s2 = inlined_call_operand.vmem [shape: f32[1,128], index: 2, kind: input, shape index: {}]
  %s3 = inlined_call_operand.vmem [shape: bf16[128,128], index: 3, kind: output, shape index: {}]
  %s4 = sld [smem:[#allocation0]]
  $region22: #{bottleneck_forward.8} parent=0
    _
  %s6 = ssub.s32 1, %s4
  %s7 = scalar_select 0, %s6, %s4
  // Predicated region
  $region2: #{bottleneck_forward.8} parent=0 // pred_check
    _
  $region3: #{bottleneck_forward.8} parent=0 // pred_check_branch
    %9 = sbr.rel (0) target = $region5
  $region4: #{bottleneck_forward.8} parent=0 // pred_region
    _
  $region5: #{bottleneck_forward.8} parent=0 // pred_fallthru
    _
  // Predicated region
  $region6: #{bottleneck_forward.8} parent=0 // pred_check
    _
  $region7: #{bottleneck_forward.8} parent=0 // pred_check_branch
    %11 = sbr.rel (0) target = $region9
  $region8: #{bottleneck_forward.8} parent=0 // pred_region
    _
  $region9: #{bottleneck_forward.8} parent=0 // pred_fallthru
    _
  // Predicated region
  $region10: #{bottleneck_forward.8} parent=0 // pred_check
    _
  $region11: #{bottleneck_forward.8} parent=0 // pred_check_branch
    %13 = sbr.rel (0) target = $region13
  $region12: #{bottleneck_forward.8} parent=0 // pred_region
    _
  $region13: #{bottleneck_forward.8} parent=0 // pred_fallthru
    _
  %v14 = vld [vmem:[%s0] sm:$0xff]
  %v15 = vld [vmem:[%s0 + $0x8] sm:$0xff]
  %v16 = vld [vmem:[%s0 + $0x10] sm:$0xff]
  %v17 = vld [vmem:[%s0 + $0x18] sm:$0xff]
  %v18 = vld [vmem:[%s0 + $0x20] sm:$0xff]
  %v19 = vld [vmem:[%s0 + $0x28] sm:$0xff]
  %v20 = vld [vmem:[%s0 + $0x30] sm:$0xff]
  %v21 = vld [vmem:[%s0 + $0x38] sm:$0xff]
  %v22 = vld [vmem:[%s0 + $0x40] sm:$0xff]
  %v23 = vld [vmem:[%s0 + $0x48] sm:$0xff]
  %v24 = vld [vmem:[%s0 + $0x50] sm:$0xff]
  %v25 = vld [vmem:[%s0 + $0x58] sm:$0xff]
  %v26 = vld [vmem:[%s0 + $0x60] sm:$0xff]
  %v27 = vld [vmem:[%s0 + $0x68] sm:$0xff]
  %v28 = vld [vmem:[%s0 + $0x70] sm:$0xff]
  %v29 = vld [vmem:[%s0 + $0x78] sm:$0xff]
  %v30 = vld [vmem:[%s1] sm:$0x1]
  %v32 = vlaneseq
  %v33 = vshrl.u32 %v32, 7
  %v34 = vsub.s32 0, %v33
  %v35 = vrot.slane %v30, %v34
  %v37 = vmul.f32 %v14, %v35
  %v38 = vmul.f32 %v15, %v35
  %v39 = vmul.f32 %v16, %v35
  %v40 = vmul.f32 %v17, %v35
  %v41 = vmul.f32 %v18, %v35
  %v42 = vmul.f32 %v19, %v35
  %v43 = vmul.f32 %v20, %v35
  %v44 = vmul.f32 %v21, %v35
  %v45 = vmul.f32 %v22, %v35
  %v46 = vmul.f32 %v23, %v35
  %v47 = vmul.f32 %v24, %v35
  %v48 = vmul.f32 %v25, %v35
  %v49 = vmul.f32 %v26, %v35
  %v50 = vmul.f32 %v27, %v35
  %v51 = vmul.f32 %v28, %v35
  %v52 = vmul.f32 %v29, %v35
  %v53 = vld [vmem:[%s2] sm:$0x1]
  %v55 = vlaneseq
  %v56 = vshrl.u32 %v55, 7
  %v57 = vsub.s32 0, %v56
  %v58 = vrot.slane %v53, %v57
  %v60 = vadd.f32 %v37, %v58
  %v61 = vadd.f32 %v38, %v58
  %v62 = vadd.f32 %v39, %v58
  %v63 = vadd.f32 %v40, %v58
  %v64 = vadd.f32 %v41, %v58
  %v65 = vadd.f32 %v42, %v58
  %v66 = vadd.f32 %v43, %v58
  %v67 = vadd.f32 %v44, %v58
  %v68 = vadd.f32 %v45, %v58
  %v69 = vadd.f32 %v46, %v58
  %v70 = vadd.f32 %v47, %v58
  %v71 = vadd.f32 %v48, %v58
  %v72 = vadd.f32 %v49, %v58
  %v73 = vadd.f32 %v50, %v58
  %v74 = vadd.f32 %v51, %v58
  %v75 = vadd.f32 %v52, %v58
  %v76 = vmax.f32 %v60, 0.0
  %v77 = vmax.f32 %v61, 0.0
  %v78 = vmax.f32 %v62, 0.0
  %v79 = vmax.f32 %v63, 0.0
  %v80 = vmax.f32 %v64, 0.0
  %v81 = vmax.f32 %v65, 0.0
  %v82 = vmax.f32 %v66, 0.0
  %v83 = vmax.f32 %v67, 0.0
  %v84 = vmax.f32 %v68, 0.0
  %v85 = vmax.f32 %v69, 0.0
  %v86 = vmax.f32 %v70, 0.0
  %v87 = vmax.f32 %v71, 0.0
  %v88 = vmax.f32 %v72, 0.0
  %v89 = vmax.f32 %v73, 0.0
  %v90 = vmax.f32 %v74, 0.0
  %v91 = vmax.f32 %v75, 0.0
  %v92 = vpack.c.bf16 %v77, %v76
  %v93 = vpack.c.bf16 %v79, %v78
  %v94 = vpack.c.bf16 %v81, %v80
  %v95 = vpack.c.bf16 %v83, %v82
  %v96 = vpack.c.bf16 %v85, %v84
  %v97 = vpack.c.bf16 %v87, %v86
  %v98 = vpack.c.bf16 %v89, %v88
  %v99 = vpack.c.bf16 %v91, %v90
  %v108 = vunpack.c.l.b16 %v92
  %v109 = vunpack.c.h.b16 %v92
  %v110 = vunpack.c.l.b16 %v93
  %v111 = vunpack.c.h.b16 %v93
  %v112 = vunpack.c.l.b16 %v94
  %v113 = vunpack.c.h.b16 %v94
  %v114 = vunpack.c.l.b16 %v95
  %v115 = vunpack.c.h.b16 %v95
  %v116 = vunpack.c.l.b16 %v96
  %v117 = vunpack.c.h.b16 %v96
  %v118 = vunpack.c.l.b16 %v97
  %v119 = vunpack.c.h.b16 %v97
  %v120 = vunpack.c.l.b16 %v98
  %v121 = vunpack.c.h.b16 %v98
  %v122 = vunpack.c.l.b16 %v99
  %v123 = vunpack.c.h.b16 %v99
  %v124 = vpack.c.b16 %v108, %v108
  %v125 = vpack.c.b16 %v109, %v109
  %v126 = vpack.c.b16 %v110, %v110
  %v127 = vpack.c.b16 %v111, %v111
  %v128 = vpack.c.b16 %v112, %v112
  %v129 = vpack.c.b16 %v113, %v113
  %v130 = vpack.c.b16 %v114, %v114
  %v131 = vpack.c.b16 %v115, %v115
  %v132 = vpack.c.b16 %v116, %v116
  %v133 = vpack.c.b16 %v117, %v117
  %v134 = vpack.c.b16 %v118, %v118
  %v135 = vpack.c.b16 %v119, %v119
  %v136 = vpack.c.b16 %v120, %v120
  %v137 = vpack.c.b16 %v121, %v121
  %v138 = vpack.c.b16 %v122, %v122
  %v139 = vpack.c.b16 %v123, %v123
  %156 = vst [vmem:[%s3] sm:$0xf] %v124
  %157 = vst [vmem:[%s3 + $0x4] sm:$0xf] %v125
  %158 = vst [vmem:[%s3 + $0x8] sm:$0xf] %v126
  %159 = vst [vmem:[%s3 + $0xc] sm:$0xf] %v127
  %160 = vst [vmem:[%s3 + $0x10] sm:$0xf] %v128
  %161 = vst [vmem:[%s3 + $0x14] sm:$0xf] %v129
  %162 = vst [vmem:[%s3 + $0x18] sm:$0xf] %v130
  %163 = vst [vmem:[%s3 + $0x1c] sm:$0xf] %v131
  %164 = vst [vmem:[%s3 + $0x20] sm:$0xf] %v132
  %165 = vst [vmem:[%s3 + $0x24] sm:$0xf] %v133
  %166 = vst [vmem:[%s3 + $0x28] sm:$0xf] %v134
  %167 = vst [vmem:[%s3 + $0x2c] sm:$0xf] %v135
  %168 = vst [vmem:[%s3 + $0x30] sm:$0xf] %v136
  %169 = vst [vmem:[%s3 + $0x34] sm:$0xf] %v137
  %170 = vst [vmem:[%s3 + $0x38] sm:$0xf] %v138
  %171 = vst [vmem:[%s3 + $0x3c] sm:$0xf] %v139
  // Predicated region
  $region14: #{bottleneck_forward.8} parent=0 // pred_check
    _
  $region15: #{bottleneck_forward.8} parent=0 // pred_check_branch
    %173 = sbr.rel (0) target = $region17
  $region16: #{bottleneck_forward.8} parent=0 // pred_region
    _
  $region17: #{bottleneck_forward.8} parent=0 // pred_fallthru
    _
  // Predicated region
  $region18: #{bottleneck_forward.8} parent=0 // pred_check
    _
  $region19: #{bottleneck_forward.8} parent=0 // pred_check_branch
    %175 = sbr.rel (0) target = $region21
  $region20: #{bottleneck_forward.8} parent=0 // pred_region
    _
  $region21: #{bottleneck_forward.8} parent=0 // pred_fallthru
    _

// kernel: bottleneck_forward.10
$region0: #{bottleneck_forward.10}
  #allocation0 [shape = 'u32[]', space=smem, size = 0x4, offset = 0x4, fixed_abs, tag = 'smem constant byte address 0x4 - core index']
  #allocation1 [shape = 'u32[144,128]{1,0:T(1,128)}', space=vmem, size = 0x12000, scoped, tag = 'internal scratch']
  %s0 = inlined_call_operand.vmem [shape: f32[32,128], index: 0, kind: input, shape index: {}]
  %s1 = inlined_call_operand.vmem [shape: f32[1,128], index: 1, kind: input, shape index: {}]
  %s2 = inlined_call_operand.vmem [shape: f32[1,128], index: 2, kind: input, shape index: {}]
  %s3 = inlined_call_operand.vmem [shape: bf16[32,128], index: 3, kind: output, shape index: {}]
  %s4 = sld [smem:[#allocation0]]
  $region22: #{bottleneck_forward.10} parent=0
    _
  %s6 = ssub.s32 1, %s4
  %s7 = scalar_select 0, %s6, %s4
  // Predicated region
  $region2: #{bottleneck_forward.10} parent=0 // pred_check
    _
  $region3: #{bottleneck_forward.10} parent=0 // pred_check_branch
    %9 = sbr.rel (0) target = $region5
  $region4: #{bottleneck_forward.10} parent=0 // pred_region
    _
  $region5: #{bottleneck_forward.10} parent=0 // pred_fallthru
    _
  // Predicated region
  $region6: #{bottleneck_forward.10} parent=0 // pred_check
    _
  $region7: #{bottleneck_forward.10} parent=0 // pred_check_branch
    %11 = sbr.rel (0) target = $region9
  $region8: #{bottleneck_forward.10} parent=0 // pred_region
    _
  $region9: #{bottleneck_forward.10} parent=0 // pred_fallthru
    _
  // Predicated region
  $region10: #{bottleneck_forward.10} parent=0 // pred_check
    _
  $region11: #{bottleneck_forward.10} parent=0 // pred_check_branch
    %13 = sbr.rel (0) target = $region13
  $region12: #{bottleneck_forward.10} parent=0 // pred_region
    _
  $region13: #{bottleneck_forward.10} parent=0 // pred_fallthru
    _
  %v14 = vld [vmem:[%s0] sm:$0xff]
  %v15 = vld [vmem:[%s0 + $0x8] sm:$0xff]
  %v16 = vld [vmem:[%s0 + $0x10] sm:$0xff]
  %v17 = vld [vmem:[%s0 + $0x18] sm:$0xff]
  %v18 = vld [vmem:[%s1] sm:$0x1]
  %v20 = vlaneseq
  %v21 = vshrl.u32 %v20, 7
  %v22 = vsub.s32 0, %v21
  %v23 = vrot.slane %v18, %v22
  %v25 = vmul.f32 %v14, %v23
  %v26 = vmul.f32 %v15, %v23
  %v27 = vmul.f32 %v16, %v23
  %v28 = vmul.f32 %v17, %v23
  %v29 = vld [vmem:[%s2] sm:$0x1]
  %v31 = vlaneseq
  %v32 = vshrl.u32 %v31, 7
  %v33 = vsub.s32 0, %v32
  %v34 = vrot.slane %v29, %v33
  %v36 = vadd.f32 %v25, %v34
  %v37 = vadd.f32 %v26, %v34
  %v38 = vadd.f32 %v27, %v34
  %v39 = vadd.f32 %v28, %v34
  %v40 = vmax.f32 %v36, 0.0
  %v41 = vmax.f32 %v37, 0.0
  %v42 = vmax.f32 %v38, 0.0
  %v43 = vmax.f32 %v39, 0.0
  %v44 = vpack.c.bf16 %v41, %v40
  %v45 = vpack.c.bf16 %v43, %v42
  %v48 = vunpack.c.l.b16 %v44
  %v49 = vunpack.c.h.b16 %v44
  %v50 = vunpack.c.l.b16 %v45
  %v51 = vunpack.c.h.b16 %v45
  %v52 = vpack.c.b16 %v48, %v48
  %v53 = vpack.c.b16 %v49, %v49
  %v54 = vpack.c.b16 %v50, %v50
  %v55 = vpack.c.b16 %v51, %v51
  %60 = vst [vmem:[%s3] sm:$0xf] %v52
  %61 = vst [vmem:[%s3 + $0x4] sm:$0xf] %v53
  %62 = vst [vmem:[%s3 + $0x8] sm:$0xf] %v54
  %63 = vst [vmem:[%s3 + $0xc] sm:$0xf] %v55
  // Predicated region
  $region14: #{bottleneck_forward.10} parent=0 // pred_check
    _
  $region15: #{bottleneck_forward.10} parent=0 // pred_check_branch
    %65 = sbr.rel (0) target = $region17
  $region16: #{bottleneck_forward.10} parent=0 // pred_region
    _
  $region17: #{bottleneck_forward.10} parent=0 // pred_fallthru
    _
  // Predicated region
  $region18: #{bottleneck_forward.10} parent=0 // pred_check
    _
  $region19: #{bottleneck_forward.10} parent=0 // pred_check_branch
    %67 = sbr.rel (0) target = $region21
  $region20: #{bottleneck_forward.10} parent=0 // pred_region
    _
  $region21: #{bottleneck_forward.10} parent=0 // pred_fallthru
    _

// kernel: bottleneck_forward.9
$region0: #{bottleneck_forward.9}
  #allocation0 [shape = 'u32[]', space=smem, size = 0x4, offset = 0x4, fixed_abs, tag = 'smem constant byte address 0x4 - core index']
  #allocation1 [shape = 'u32[144,128]{1,0:T(1,128)}', space=vmem, size = 0x12000, scoped, tag = 'internal scratch']
  #allocation2 [shape = 'f32[8,128]{1,0:T(8,128)}', space=vmem, size = 0x1000, scoped, tag = 'scratch operand']
  %s0 = inlined_call_operand.vmem [shape: bf16[2,10,10,128], index: 0, kind: input, shape index: {}]
  %s1 = inlined_call_operand.vmem [shape: bf16[9,128,128], index: 1, kind: input, shape index: {}]
  %s2 = inlined_call_operand.vmem [shape: f32[2,4,4,128], index: 2, kind: output, shape index: {0}]
  %s3 = inlined_call_operand.vmem [shape: f32[2,4,2,128], index: 3, kind: output, shape index: {1}]
  %4 = xla_tuple %s2, %s3
  %s5 = sld [smem:[#allocation0]]
  $region57: #{bottleneck_forward.9} parent=0
    _
  %s7 = ssub.s32 1, %s5
  %s8 = scalar_select 0, %s7, %s5
  loop: start=0, step=1, limit=26
  $region2: #{bottleneck_forward.9} parent=0 // loop_pre_header
    _
  $region3: #{bottleneck_forward.9} parent=0 // loop_header
    %s10 = sphi 0, %s14
    %p11 = scmp.ge.s32.totalorder %s10, 26
    %s17 = sphi 0, %s36
    %s18 = sphi 0, %s32
    %s19 = sphi 0, %s28
    %s20 = sphi 0, %s17
    %s21 = sphi 0, %s18
    %s22 = sphi 0, %s19
    %s23 = sphi 0, %s20
    %s24 = sphi 0, %s21
    %s25 = sphi 0, %s22
    %s45 = sphi 0, %s47
    %s48 = sphi 0, %s45
    %s49 = sphi 0, %s48
    %s65 = sphi 0, %s49
    %s69 = sphi 0, %s69
    %s71 = sphi 0, %s69
    %s72 = sphi 0, %s71
    %s86 = sphi 0, %s72
    %s94 = sphi 0, %s96
    %s97 = sphi 0, %s94
    %s98 = sphi 0, %s97
    %s114 = sphi 0, %s98
    %s122 = sphi 0, %s124
    %s125 = sphi 0, %s122
    %s126 = sphi 0, %s125
    %s142 = sphi 0, %s126
  $region4: #{bottleneck_forward.9} parent=0 // loop_header_branch
    %13 = sbr.rel (%p11) target = $region8
  $region5: #{bottleneck_forward.9} parent=0 // loop_body
    %s15 = ssub.s32 %s10, 1
    %s16 = ssub.s32 %s10, 2
    %s26 = sadd.s32 1, %s19
    %p27 = scmp.ge.s32.totalorder %s26, 3
    %s28 = scalar_select %p27, 0, %s26
    %s29 = sadd.s32 1, %s18
    %s30 = scalar_select %p27, %s29, %s18
    %p31 = scmp.ge.s32.totalorder %s30, 4
    %s32 = scalar_select %p31, 0, %s30
    %s33 = sadd.s32 1, %s17
    %s34 = scalar_select %p31, %s33, %s17
    %p35 = scmp.ge.s32.totalorder %s34, 2
    %s36 = scalar_select %p35, 0, %s34
    %s37 = smul.u32 %s18, 2
    %s38 = sadd.s32 %s37, %s19
    %s39 = smul.u32 %s32, 2
    %s40 = sadd.s32 %s39, %s28
    %s41 = ssub.s32 %s17, %s36
    %s42 = ssub.s32 %s38, %s40
    %s43 = sor.u32 %s41, %s42
    %p44 = scmp.eq.s32.totalorder %s43, 0
    %s46 = sadd.s32 %s45, 1
    %s47 = scalar_select %p44, %s45, %s46
    %p50 = pneg %p44
    %p51 = scmp.eq.s32.totalorder %s10, 23
    %p52 = por %p50, %p51
    %p53 = scmp.ne.s32.totalorder %s45, %s48
    %p54 = scmp.eq.s32.totalorder %s10, 0
    %p55 = por %p53, %p54
    %p56 = scmp.ne.s32.totalorder %s45, %s48
    %p57 = scmp.eq.s32.totalorder %s15, 23
    %p58 = por %p56, %p57
    %p59 = scmp.ne.s32.totalorder %s48, %s49
    %p60 = scmp.eq.s32.totalorder %s15, 0
    %p61 = por %p59, %p60
    %p62 = scmp.ne.s32.totalorder %s48, %s49
    %p63 = scmp.eq.s32.totalorder %s16, 23
    %p64 = por %p62, %p63
    %p66 = scmp.ne.s32.totalorder %s49, %s65
    %p67 = scmp.eq.s32.totalorder %s16, 0
    %p68 = por %p66, %p67
    %s70 = sadd.s32 %s69, 1
    %p73 = scmp.eq.s32.totalorder %s10, 23
    %p74 = scmp.ne.s32.totalorder %s69, %s71
    %p75 = scmp.eq.s32.totalorder %s10, 0
    %p76 = por %p74, %p75
    %p77 = scmp.ne.s32.totalorder %s69, %s71
    %p78 = scmp.eq.s32.totalorder %s15, 23
    %p79 = por %p77, %p78
    %p80 = scmp.ne.s32.totalorder %s71, %s72
    %p81 = scmp.eq.s32.totalorder %s15, 0
    %p82 = por %p80, %p81
    %p83 = scmp.ne.s32.totalorder %s71, %s72
    %p84 = scmp.eq.s32.totalorder %s16, 23
    %p85 = por %p83, %p84
    %p87 = scmp.ne.s32.totalorder %s72, %s86
    %p88 = scmp.eq.s32.totalorder %s16, 0
    %p89 = por %p87, %p88
    %s90 = ssub.s32 %s17, %s36
    %s91 = ssub.s32 %s18, %s32
    %s92 = sor.u32 %s90, %s91
    %p93 = scmp.eq.s32.totalorder %s92, 0
    %s95 = sadd.s32 %s94, 1
    %s96 = scalar_select %p93, %s94, %s95
    %p99 = pneg %p93
    %p100 = scmp.eq.s32.totalorder %s10, 23
    %p101 = por %p99, %p100
    %p102 = scmp.ne.s32.totalorder %s94, %s97
    %p103 = scmp.eq.s32.totalorder %s10, 0
    %p104 = por %p102, %p103
    %p105 = scmp.ne.s32.totalorder %s94, %s97
    %p106 = scmp.eq.s32.totalorder %s15, 23
    %p107 = por %p105, %p106
    %p108 = scmp.ne.s32.totalorder %s97, %s98
    %p109 = scmp.eq.s32.totalorder %s15, 0
    %p110 = por %p108, %p109
    %p111 = scmp.ne.s32.totalorder %s97, %s98
    %p112 = scmp.eq.s32.totalorder %s16, 23
    %p113 = por %p111, %p112
    %p115 = scmp.ne.s32.totalorder %s98, %s114
    %p116 = scmp.eq.s32.totalorder %s16, 0
    %p117 = por %p115, %p116
    %s118 = ssub.s32 %s17, %s36
    %s119 = ssub.s32 %s18, %s32
    %s120 = sor.u32 %s118, %s119
    %p121 = scmp.eq.s32.totalorder %s120, 0
    %s123 = sadd.s32 %s122, 1
    %s124 = scalar_select %p121, %s122, %s123
    %p127 = pneg %p121
    %p128 = scmp.eq.s32.totalorder %s10, 23
    %p129 = por %p127, %p128
    %p130 = scmp.ne.s32.totalorder %s122, %s125
    %p131 = scmp.eq.s32.totalorder %s10, 0
    %p132 = por %p130, %p131
    %p133 = scmp.ne.s32.totalorder %s122, %s125
    %p134 = scmp.eq.s32.totalorder %s15, 23
    %p135 = por %p133, %p134
    %p136 = scmp.ne.s32.totalorder %s125, %s126
    %p137 = scmp.eq.s32.totalorder %s15, 0
    %p138 = por %p136, %p137
    %p139 = scmp.ne.s32.totalorder %s125, %s126
    %p140 = scmp.eq.s32.totalorder %s16, 23
    %p141 = por %p139, %p140
    %p143 = scmp.ne.s32.totalorder %s126, %s142
    %p144 = scmp.eq.s32.totalorder %s16, 0
    %p145 = por %p143, %p144
    %p146 = scmp.le.s32.totalorder 1, %s10
    %p147 = scmp.lt.s32.totalorder %s10, 25
    %p148 = pnand %p146, %p147
    %p149 = pneg %p148
    // Predicated region
    $region9: #{bottleneck_forward.9} parent=5 // pred_check
      _
    $region10: #{bottleneck_forward.9} parent=5 // pred_check_branch
      %151 = sbr.rel (%p148) target = $region12
    $region11: #{bottleneck_forward.9} parent=5 // pred_region
      %s152 = ssub.s32 %s10, 1
      // Predicated region
      $region13: #{bottleneck_forward.9} parent=11 // pred_check
        %p153 = pneg %p82
      $region14: #{bottleneck_forward.9} parent=11 // pred_check_branch
        %155 = sbr.rel (%p153) target = $region16
      $region15: #{bottleneck_forward.9} parent=11 // pred_region
        _
      $region16: #{bottleneck_forward.9} parent=11 // pred_fallthru
        _
    $region12: #{bottleneck_forward.9} parent=5 // pred_fallthru
      _
    %p156 = scmp.lt.s32.totalorder %s10, 24
    // Predicated region
    $region17: #{bottleneck_forward.9} parent=5 // pred_check
      %p157 = pneg %p156
    $region18: #{bottleneck_forward.9} parent=5 // pred_check_branch
      %159 = sbr.rel (%p157) target = $region20
    $region19: #{bottleneck_forward.9} parent=5 // pred_region
      // Predicated region
      $region21: #{bottleneck_forward.9} parent=19 // pred_check
        %p160 = pneg %p55
      $region22: #{bottleneck_forward.9} parent=19 // pred_check_branch
        %162 = sbr.rel (%p160) target = $region24
      $region23: #{bottleneck_forward.9} parent=19 // pred_region
        %s163 = smul.u32 %s18, 2
        %s164 = sadd.s32 %s163, %s19
        %p165 = scmp.lt.s32.totalorder %s17, 1
        %s166 = scalar_select %p165, %s17, 1
        %p167 = scmp.lt.s32.totalorder %s164, 9
        %s168 = scalar_select %p167, %s164, 9
        %s169 = smul.addr %s168, 2
        %s170 = smul.addr %s166, 20
        %s171 = sadd.s32 %s169, %s170
        %s172 = smul.addr %s171, 4
        %s173 = scalar_lea.vmem %s0, %s172
        %s174 = smul.u32 %s18, 2
        %s175 = sadd.s32 %s174, %s19
      $region24: #{bottleneck_forward.9} parent=19 // pred_fallthru
        _
    $region20: #{bottleneck_forward.9} parent=5 // pred_fallthru
      _
    %p176 = scmp.le.s32.totalorder 1, %s10
    %p177 = scmp.lt.s32.totalorder %s10, 25
    %p178 = pnand %p176, %p177
    %p179 = pneg %p178
    // Predicated region
    $region25: #{bottleneck_forward.9} parent=5 // pred_check
      _
    $region26: #{bottleneck_forward.9} parent=5 // pred_check_branch
      %181 = sbr.rel (%p178) target = $region28
    $region27: #{bottleneck_forward.9} parent=5 // pred_region
      %s182 = ssub.s32 %s10, 1
      %s183 = smul.u32 %s21, 2
      %s184 = sadd.s32 %s183, %s22
      %p185 = scmp.lt.s32.totalorder %s20, 1
      %s186 = scalar_select %p185, %s20, 1
      %p187 = scmp.lt.s32.totalorder %s184, 9
      %s188 = scalar_select %p187, %s184, 9
      %s189 = smul.addr %s188, 2
      %s190 = smul.addr %s186, 20
      %s191 = sadd.s32 %s189, %s190
      %s192 = smul.addr %s191, 4
      %s193 = scalar_lea.vmem %s0, %s192
      %p194 = pneg %p61
      %p195 = pneg %p58
      %p196 = pneg %p82
      %p197 = pneg %p79
      %p198 = pneg %p110
      %p199 = pneg %p107
      %p200 = scmp.lt.s32.totalorder %s20, 1
      %s201 = scalar_select %p200, %s20, 1
      %p202 = scmp.lt.s32.totalorder %s21, 3
      %s203 = scalar_select %p202, %s21, 3
      %s204 = smul.addr %s201, 4
      %s205 = sadd.s32 %s203, %s204
      %s206 = smul.addr %s205, 4
      %s207 = scalar_lea.vmem %s2, %s206
      %p208 = pneg %p138
      %p209 = pneg %p135
      %p210 = scmp.lt.s32.totalorder %s20, 1
      %s211 = scalar_select %p210, %s20, 1
      %p212 = scmp.lt.s32.totalorder %s21, 3
      %s213 = scalar_select %p212, %s21, 3
      %s214 = smul.addr %s211, 4
      %s215 = sadd.s32 %s213, %s214
      %s216 = smul.addr %s215, 2
      %s217 = scalar_lea.vmem %s3, %s216
      %s218 = smul.u32 %s21, 2
      %s219 = sadd.s32 %s218, %s22
      %p220 = scmp.lt.s32.totalorder %s20, 1
      %s221 = scalar_select %p220, %s20, 1
      %p222 = scmp.lt.s32.totalorder %s219, 9
      %s223 = scalar_select %p222, %s219, 9
      %s224 = smul.addr %s223, 2
      %s225 = smul.addr %s221, 20
      %s226 = sadd.s32 %s224, %s225
      %s227 = smul.addr %s226, 4
      %s228 = scalar_lea.vmem %s0, %s227
      %s229 = smul.u32 %s21, 2
      %s230 = sadd.s32 %s229, %s22
      %p231 = scmp.lt.s32.totalorder %s20, 1
      %s232 = scalar_select %p231, %s20, 1
      %p233 = scmp.lt.s32.totalorder %s21, 3
      %s234 = scalar_select %p233, %s21, 3
      %s235 = smul.addr %s232, 4
      %s236 = sadd.s32 %s234, %s235
      %s237 = smul.addr %s236, 4
      %s238 = scalar_lea.vmem %s2, %s237
      %p239 = scmp.lt.s32.totalorder %s20, 1
      %s240 = scalar_select %p239, %s20, 1
      %p241 = scmp.lt.s32.totalorder %s21, 3
      %s242 = scalar_select %p241, %s21, 3
      %s243 = smul.addr %s240, 4
      %s244 = sadd.s32 %s242, %s243
      %s245 = smul.addr %s244, 2
      %s246 = scalar_lea.vmem %s3, %s245
      %p248 = scmp.eq.s32.totalorder %s22, 0
      // Predicated region
      $region29: #{bottleneck_forward.9} parent=27 // pred_check
        %p249 = pneg %p248
      $region30: #{bottleneck_forward.9} parent=27 // pred_check_branch
        %251 = sbr.rel (%p249) target = $region32
      $region31: #{bottleneck_forward.9} parent=27 // pred_region
        %252 = vst [vmem:[#allocation2] sm:$0xff] 0.0
      $region32: #{bottleneck_forward.9} parent=27 // pred_fallthru
        _
      %v253 = vld [vmem:[#allocation2] sm:$0xff]
      %v254 = vld [vmem:[%s228] sm:$0xf]
      %s255 = smul.u32 %s22, 3
      %s256 = smul.u32 %s255, 16
      %s257 = smul.addr %s256, 4
      %s258 = scalar_lea.vmem %s1, %s257
      %v259 = vld [vmem:[%s258] sm:$0xf]
      %v260 = vld [vmem:[%s258 + $0x4] sm:$0xf]
      %v261 = vld [vmem:[%s258 + $0x8] sm:$0xf]
      %v262 = vld [vmem:[%s258 + $0xc] sm:$0xf]
      %v263 = vld [vmem:[%s258 + $0x10] sm:$0xf]
      %v264 = vld [vmem:[%s258 + $0x14] sm:$0xf]
      %v265 = vld [vmem:[%s258 + $0x18] sm:$0xf]
      %v266 = vld [vmem:[%s258 + $0x1c] sm:$0xf]
      %v267 = vld [vmem:[%s258 + $0x20] sm:$0xf]
      %v268 = vld [vmem:[%s258 + $0x24] sm:$0xf]
      %v269 = vld [vmem:[%s258 + $0x28] sm:$0xf]
      %v270 = vld [vmem:[%s258 + $0x2c] sm:$0xf]
      %v271 = vld [vmem:[%s258 + $0x30] sm:$0xf]
      %v272 = vld [vmem:[%s258 + $0x34] sm:$0xf]
      %v273 = vld [vmem:[%s258 + $0x38] sm:$0xf]
      %v274 = vld [vmem:[%s258 + $0x3c] sm:$0xf]
      %v291 = vunpack.c.l.b16 %v259
      %v292 = vunpack.c.l.b16 %v260
      %v293 = vunpack.c.l.b16 %v261
      %v294 = vunpack.c.l.b16 %v262
      %v295 = vunpack.c.l.b16 %v263
      %v296 = vunpack.c.l.b16 %v264
      %v297 = vunpack.c.l.b16 %v265
      %v298 = vunpack.c.l.b16 %v266
      %v299 = vunpack.c.l.b16 %v267
      %v300 = vunpack.c.l.b16 %v268
      %v301 = vunpack.c.l.b16 %v269
      %v302 = vunpack.c.l.b16 %v270
      %v303 = vunpack.c.l.b16 %v271
      %v304 = vunpack.c.l.b16 %v272
      %v305 = vunpack.c.l.b16 %v273
      %v306 = vunpack.c.l.b16 %v274
      %v307 = vpack.c.b16 %v292, %v291
      %v308 = vpack.c.b16 %v294, %v293
      %v309 = vpack.c.b16 %v296, %v295
      %v310 = vpack.c.b16 %v298, %v297
      %v311 = vpack.c.b16 %v300, %v299
      %v312 = vpack.c.b16 %v302, %v301
      %v313 = vpack.c.b16 %v304, %v303
      %v314 = vpack.c.b16 %v306, %v305
      %323 = vmatprep.subr.bf16.mxu0 0
      %324 = vmatpush1.bf16.msra.mxu0 %v307
      %325 = vmatprep.subr.bf16.mxu0 0
      %326 = vmatpush1.bf16.msra.mxu0 %v308
      %327 = vmatprep.subr.bf16.mxu0 0
      %328 = vmatpush1.bf16.msra.mxu0 %v309
      %329 = vmatprep.subr.bf16.mxu0 0
      %330 = vmatpush1.bf16.msra.mxu0 %v310
      %331 = vmatprep.subr.bf16.mxu0 0
      %332 = vmatpush1.bf16.msra.mxu0 %v311
      %333 = vmatprep.subr.bf16.mxu0 0
      %334 = vmatpush1.bf16.msra.mxu0 %v312
      %335 = vmatprep.subr.bf16.mxu0 0
      %336 = vmatpush1.bf16.msra.mxu0 %v313
      %337 = vmatprep.subr.bf16.mxu0 0
      %338 = vmatpush1.bf16.msra.mxu0 %v314
      %339 = vmatprep.subr.bf16.mxu0 0
      %340 = vmatpush1.bf16.msra.mxu0 0
      %341 = vmatprep.subr.bf16.mxu0 0
      %342 = vmatpush1.bf16.msra.mxu0 0
      %343 = vmatprep.subr.bf16.mxu0 0
      %344 = vmatpush1.bf16.msra.mxu0 0
      %345 = vmatprep.subr.bf16.mxu0 0
      %346 = vmatpush1.bf16.msra.mxu0 0
      %347 = vmatprep.subr.bf16.mxu0 0
      %348 = vmatpush1.bf16.msra.mxu0 0
      %349 = vmatprep.subr.bf16.mxu0 0
      %350 = vmatpush1.bf16.msra.mxu0 0
      %351 = vmatprep.subr.bf16.mxu0 0
      %352 = vmatpush1.bf16.msra.mxu0 0
      %353 = vmatprep.subr.bf16.mxu0 0
      %354 = vmatpush1.bf16.msra.mxu0 0
      %355 = vmatprep.mubr.bf16.mxu0 0
      %356 = vmatmul.mubr.bf16.gmra.mrb[0].mxu0 %v254
      %v357 = vpop.f32.mrb[0].mxu0
      %v358 = vadd.f32 0.0, %v357
      %v359 = vpop.f32.mrb[0].mxu0
      %v360 = vpop.f32.mrb[0].mxu0
      %v361 = vpop.f32.mrb[0].mxu0
      %362 = vdwg.mxu0
      %v363 = vadd.f32 %v253, %v358
      %v364 = vld [vmem:[%s228] sm:$0xf]
      %v365 = vld [vmem:[%s228 + $0x4] sm:$0x1]
      %s366 = sadd.s32 %s255, 1
      %s367 = smul.u32 %s366, 16
      %s368 = smul.addr %s367, 4
      %s369 = scalar_lea.vmem %s1, %s368
      %v370 = vld [vmem:[%s369] sm:$0xf]
      %v371 = vld [vmem:[%s369 + $0x4] sm:$0xf]
      %v372 = vld [vmem:[%s369 + $0x8] sm:$0xf]
      %v373 = vld [vmem:[%s369 + $0xc] sm:$0xf]
      %v374 = vld [vmem:[%s369 + $0x10] sm:$0xf]
      %v375 = vld [vmem:[%s369 + $0x14] sm:$0xf]
      %v376 = vld [vmem:[%s369 + $0x18] sm:$0xf]
      %v377 = vld [vmem:[%s369 + $0x1c] sm:$0xf]
      %v378 = vld [vmem:[%s369 + $0x20] sm:$0xf]
      %v379 = vld [vmem:[%s369 + $0x24] sm:$0xf]
      %v380 = vld [vmem:[%s369 + $0x28] sm:$0xf]
      %v381 = vld [vmem:[%s369 + $0x2c] sm:$0xf]
      %v382 = vld [vmem:[%s369 + $0x30] sm:$0xf]
      %v383 = vld [vmem:[%s369 + $0x34] sm:$0xf]
      %v384 = vld [vmem:[%s369 + $0x38] sm:$0xf]
      %v385 = vld [vmem:[%s369 + $0x3c] sm:$0xf]
      %v388 = vunpack.c.l.b16 %v364
      %v389 = vunpack.c.l.b16 %v365
      %v390 = vpack.c.b16 %v389, %v388
      %v392 = vshrl.u32 %v390, 16
      %v394 = vshll.u32 %v390, 16
      %v396 = vrot.slane %v394, 1
      %v397 = vor.u32 %v392, %v396
      %v415 = vunpack.c.l.b16 %v370
      %v416 = vunpack.c.l.b16 %v371
      %v417 = vunpack.c.l.b16 %v372
      %v418 = vunpack.c.l.b16 %v373
      %v419 = vunpack.c.l.b16 %v374
      %v420 = vunpack.c.l.b16 %v375
      %v421 = vunpack.c.l.b16 %v376
      %v422 = vunpack.c.l.b16 %v377
      %v423 = vunpack.c.l.b16 %v378
      %v424 = vunpack.c.l.b16 %v379
      %v425 = vunpack.c.l.b16 %v380
      %v426 = vunpack.c.l.b16 %v381
      %v427 = vunpack.c.l.b16 %v382
      %v428 = vunpack.c.l.b16 %v383
      %v429 = vunpack.c.l.b16 %v384
      %v430 = vunpack.c.l.b16 %v385
      %v431 = vpack.c.b16 %v416, %v415
      %v432 = vpack.c.b16 %v418, %v417
      %v433 = vpack.c.b16 %v420, %v419
      %v434 = vpack.c.b16 %v422, %v421
      %v435 = vpack.c.b16 %v424, %v423
      %v436 = vpack.c.b16 %v426, %v425
      %v437 = vpack.c.b16 %v428, %v427
      %v438 = vpack.c.b16 %v430, %v429
      %447 = vmatprep.subr.bf16.mxu0 0
      %448 = vmatpush1.bf16.msra.mxu0 %v431
      %449 = vmatprep.subr.bf16.mxu0 0
      %450 = vmatpush1.bf16.msra.mxu0 %v432
      %451 = vmatprep.subr.bf16.mxu0 0
      %452 = vmatpush1.bf16.msra.mxu0 %v433
      %453 = vmatprep.subr.bf16.mxu0 0
      %454 = vmatpush1.bf16.msra.mxu0 %v434
      %455 = vmatprep.subr.bf16.mxu0 0
      %456 = vmatpush1.bf16.msra.mxu0 %v435
      %457 = vmatprep.subr.bf16.mxu0 0
      %458 = vmatpush1.bf16.msra.mxu0 %v436
      %459 = vmatprep.subr.bf16.mxu0 0
      %460 = vmatpush1.bf16.msra.mxu0 %v437
      %461 = vmatprep.subr.bf16.mxu0 0
      %462 = vmatpush1.bf16.msra.mxu0 %v438
      %463 = vmatprep.subr.bf16.mxu0 0
      %464 = vmatpush1.bf16.msra.mxu0 0
      %465 = vmatprep.subr.bf16.mxu0 0
      %466 = vmatpush1.bf16.msra.mxu0 0
      %467 = vmatprep.subr.bf16.mxu0 0
      %468 = vmatpush1.bf16.msra.mxu0 0
      %469 = vmatprep.subr.bf16.mxu0 0
      %470 = vmatpush1.bf16.msra.mxu0 0
      %471 = vmatprep.subr.bf16.mxu0 0
      %472 = vmatpush1.bf16.msra.mxu0 0
      %473 = vmatprep.subr.bf16.mxu0 0
      %474 = vmatpush1.bf16.msra.mxu0 0
      %475 = vmatprep.subr.bf16.mxu0 0
      %476 = vmatpush1.bf16.msra.mxu0 0
      %477 = vmatprep.subr.bf16.mxu0 0
      %478 = vmatpush1.bf16.msra.mxu0 0
      %479 = vmatprep.mubr.bf16.mxu0 0
      %480 = vmatmul.mubr.bf16.gmra.mrb[0].mxu0 %v397
      %v481 = vpop.f32.mrb[0].mxu0
      %v482 = vadd.f32 0.0, %v481
      %v483 = vpop.f32.mrb[0].mxu0
      %v484 = vpop.f32.mrb[0].mxu0
      %v485 = vpop.f32.mrb[0].mxu0
      %486 = vdwg.mxu0
      %v487 = vadd.f32 %v363, %v482
      %v488 = vld [vmem:[%s228] sm:$0xe]
      %s489 = sadd.s32 %s255, 2
      %s490 = smul.u32 %s489, 16
      %s491 = smul.addr %s490, 4
      %s492 = scalar_lea.vmem %s1, %s491
      %v493 = vld [vmem:[%s492] sm:$0xf]
      %v494 = vld [vmem:[%s492 + $0x4] sm:$0xf]
      %v495 = vld [vmem:[%s492 + $0x8] sm:$0xf]
      %v496 = vld [vmem:[%s492 + $0xc] sm:$0xf]
      %v497 = vld [vmem:[%s492 + $0x10] sm:$0xf]
      %v498 = vld [vmem:[%s492 + $0x14] sm:$0xf]
      %v499 = vld [vmem:[%s492 + $0x18] sm:$0xf]
      %v500 = vld [vmem:[%s492 + $0x1c] sm:$0xf]
      %v501 = vld [vmem:[%s492 + $0x20] sm:$0xf]
      %v502 = vld [vmem:[%s492 + $0x24] sm:$0xf]
      %v503 = vld [vmem:[%s492 + $0x28] sm:$0xf]
      %v504 = vld [vmem:[%s492 + $0x2c] sm:$0xf]
      %v505 = vld [vmem:[%s492 + $0x30] sm:$0xf]
      %v506 = vld [vmem:[%s492 + $0x34] sm:$0xf]
      %v507 = vld [vmem:[%s492 + $0x38] sm:$0xf]
      %v508 = vld [vmem:[%s492 + $0x3c] sm:$0xf]
      %v510 = vunpack.c.l.b16 %v488
      %v511 = vpack.c.b16 %v389, %v510
      %v512 = vrot.slane %v511, 1
      %v530 = vunpack.c.l.b16 %v493
      %v531 = vunpack.c.l.b16 %v494
      %v532 = vunpack.c.l.b16 %v495
      %v533 = vunpack.c.l.b16 %v496
      %v534 = vunpack.c.l.b16 %v497
      %v535 = vunpack.c.l.b16 %v498
      %v536 = vunpack.c.l.b16 %v499
      %v537 = vunpack.c.l.b16 %v500
      %v538 = vunpack.c.l.b16 %v501
      %v539 = vunpack.c.l.b16 %v502
      %v540 = vunpack.c.l.b16 %v503
      %v541 = vunpack.c.l.b16 %v504
      %v542 = vunpack.c.l.b16 %v505
      %v543 = vunpack.c.l.b16 %v506
      %v544 = vunpack.c.l.b16 %v507
      %v545 = vunpack.c.l.b16 %v508
      %v546 = vpack.c.b16 %v531, %v530
      %v547 = vpack.c.b16 %v533, %v532
      %v548 = vpack.c.b16 %v535, %v534
      %v549 = vpack.c.b16 %v537, %v536
      %v550 = vpack.c.b16 %v539, %v538
      %v551 = vpack.c.b16 %v541, %v540
      %v552 = vpack.c.b16 %v543, %v542
      %v553 = vpack.c.b16 %v545, %v544
      %562 = vmatprep.subr.bf16.mxu0 0
      %563 = vmatpush1.bf16.msra.mxu0 %v546
      %564 = vmatprep.subr.bf16.mxu0 0
      %565 = vmatpush1.bf16.msra.mxu0 %v547
      %566 = vmatprep.subr.bf16.mxu0 0
      %567 = vmatpush1.bf16.msra.mxu0 %v548
      %568 = vmatprep.subr.bf16.mxu0 0
      %569 = vmatpush1.bf16.msra.mxu0 %v549
      %570 = vmatprep.subr.bf16.mxu0 0
      %571 = vmatpush1.bf16.msra.mxu0 %v550
      %572 = vmatprep.subr.bf16.mxu0 0
      %573 = vmatpush1.bf16.msra.mxu0 %v551
      %574 = vmatprep.subr.bf16.mxu0 0
      %575 = vmatpush1.bf16.msra.mxu0 %v552
      %576 = vmatprep.subr.bf16.mxu0 0
      %577 = vmatpush1.bf16.msra.mxu0 %v553
      %578 = vmatprep.subr.bf16.mxu0 0
      %579 = vmatpush1.bf16.msra.mxu0 0
      %580 = vmatprep.subr.bf16.mxu0 0
      %581 = vmatpush1.bf16.msra.mxu0 0
      %582 = vmatprep.subr.bf16.mxu0 0
      %583 = vmatpush1.bf16.msra.mxu0 0
      %584 = vmatprep.subr.bf16.mxu0 0
      %585 = vmatpush1.bf16.msra.mxu0 0
      %586 = vmatprep.subr.bf16.mxu0 0
      %587 = vmatpush1.bf16.msra.mxu0 0
      %588 = vmatprep.subr.bf16.mxu0 0
      %589 = vmatpush1.bf16.msra.mxu0 0
      %590 = vmatprep.subr.bf16.mxu0 0
      %591 = vmatpush1.bf16.msra.mxu0 0
      %592 = vmatprep.subr.bf16.mxu0 0
      %593 = vmatpush1.bf16.msra.mxu0 0
      %594 = vmatprep.mubr.bf16.mxu0 0
      %595 = vmatmul.mubr.bf16.gmra.mrb[0].mxu0 %v512
      %v596 = vpop.f32.mrb[0].mxu0
      %v597 = vadd.f32 0.0, %v596
      %v598 = vpop.f32.mrb[0].mxu0
      %v599 = vpop.f32.mrb[0].mxu0
      %v600 = vpop.f32.mrb[0].mxu0
      %601 = vdwg.mxu0
      %v602 = vadd.f32 %v487, %v597
      %603 = vst [vmem:[#allocation2] sm:$0xff] %v602
      %p604 = scmp.eq.s32.totalorder %s22, 2
      // Predicated region
      $region33: #{bottleneck_forward.9} parent=27 // pred_check
        %p605 = pneg %p604
      $region34: #{bottleneck_forward.9} parent=27 // pred_check_branch
        %607 = sbr.rel (%p605) target = $region36
      $region35: #{bottleneck_forward.9} parent=27 // pred_region
        %v608 = vld [vmem:[#allocation2] ss:$2 sm:$0xf]
        %609 = vst [vmem:[%s238] sm:$0xf] %v608
        %vm610 = vcmask 1043456
        %v611 = vsel %vm610, %v608, 0.0
        %v612 = vrot.slane %v611, 4
        %v613 = vadd.f32 %v611, %v612
        %v614 = vrot.slane %v613, 2
        %v615 = vadd.f32 %v613, %v614
        %v616 = vrot.slane %v615, 1
        %v617 = vadd.f32 %v615, %v616
        %618 = vst [vmem:[%s246] sm:$0x1] %v617
        %v619 = vmul.f32 %v608, %v608
        %v620 = vsel %vm610, %v619, 0.0
        %v621 = vrot.slane %v620, 4
        %v622 = vadd.f32 %v620, %v621
        %v623 = vrot.slane %v622, 2
        %v624 = vadd.f32 %v622, %v623
        %v625 = vrot.slane %v624, 1
        %v626 = vadd.f32 %v624, %v625
        %627 = vst [vmem:[%s246 + $0x1] sm:$0x1] %v626
      $region36: #{bottleneck_forward.9} parent=27 // pred_fallthru
        _
      %p628 = scmp.lt.s32.totalorder %s20, 1
      %s629 = scalar_select %p628, %s20, 1
      %p630 = scmp.lt.s32.totalorder %s21, 3
      %s631 = scalar_select %p630, %s21, 3
      %s632 = smul.addr %s629, 4
      %s633 = sadd.s32 %s631, %s632
      %s634 = smul.addr %s633, 4
      %s635 = scalar_lea.vmem %s2, %s634
      %p636 = scmp.lt.s32.totalorder %s20, 1
      %s637 = scalar_select %p636, %s20, 1
      %p638 = scmp.lt.s32.totalorder %s21, 3
      %s639 = scalar_select %p638, %s21, 3
      %s640 = smul.addr %s637, 4
      %s641 = sadd.s32 %s639, %s640
      %s642 = smul.addr %s641, 2
      %s643 = scalar_lea.vmem %s3, %s642
      // Predicated region
      $region37: #{bottleneck_forward.9} parent=27 // pred_check
        %p644 = pneg %p107
      $region38: #{bottleneck_forward.9} parent=27 // pred_check_branch
        %646 = sbr.rel (%p644) target = $region40
      $region39: #{bottleneck_forward.9} parent=27 // pred_region
        _
      $region40: #{bottleneck_forward.9} parent=27 // pred_fallthru
        _
      // Predicated region
      $region41: #{bottleneck_forward.9} parent=27 // pred_check
        %p647 = pneg %p135
      $region42: #{bottleneck_forward.9} parent=27 // pred_check_branch
        %649 = sbr.rel (%p647) target = $region44
      $region43: #{bottleneck_forward.9} parent=27 // pred_region
        _
      $region44: #{bottleneck_forward.9} parent=27 // pred_fallthru
        _
    $region28: #{bottleneck_forward.9} parent=5 // pred_fallthru
      _
    %p650 = scmp.le.s32.totalorder 2, %s10
    // Predicated region
    $region45: #{bottleneck_forward.9} parent=5 // pred_check
      %p651 = pneg %p650
    $region46: #{bottleneck_forward.9} parent=5 // pred_check_branch
      %653 = sbr.rel (%p651) target = $region48
    $region47: #{bottleneck_forward.9} parent=5 // pred_region
      %s654 = ssub.s32 %s10, 2
      // Predicated region
      $region49: #{bottleneck_forward.9} parent=47 // pred_check
        %p655 = pneg %p113
      $region50: #{bottleneck_forward.9} parent=47 // pred_check_branch
        %657 = sbr.rel (%p655) target = $region52
      $region51: #{bottleneck_forward.9} parent=47 // pred_region
        %p658 = scmp.lt.s32.totalorder %s23, 1
        %s659 = scalar_select %p658, %s23, 1
        %p660 = scmp.lt.s32.totalorder %s24, 3
        %s661 = scalar_select %p660, %s24, 3
        %s662 = smul.addr %s659, 4
        %s663 = sadd.s32 %s661, %s662
        %s664 = smul.addr %s663, 4
        %s665 = scalar_lea.vmem %s2, %s664
      $region52: #{bottleneck_forward.9} parent=47 // pred_fallthru
        _
      // Predicated region
      $region53: #{bottleneck_forward.9} parent=47 // pred_check
        %p666 = pneg %p141
      $region54: #{bottleneck_forward.9} parent=47 // pred_check_branch
        %668 = sbr.rel (%p666) target = $region56
      $region55: #{bottleneck_forward.9} parent=47 // pred_region
        %p669 = scmp.lt.s32.totalorder %s23, 1
        %s670 = scalar_select %p669, %s23, 1
        %p671 = scmp.lt.s32.totalorder %s24, 3
        %s672 = scalar_select %p671, %s24, 3
        %s673 = smul.addr %s670, 4
        %s674 = sadd.s32 %s672, %s673
        %s675 = smul.addr %s674, 2
        %s676 = scalar_lea.vmem %s3, %s675
      $region56: #{bottleneck_forward.9} parent=47 // pred_fallthru
        _
    $region48: #{bottleneck_forward.9} parent=5 // pred_fallthru
      _
  $region6: #{bottleneck_forward.9} parent=0 // loop_footer
    %s14 = sadd.s32 1, %s10
  $region7: #{bottleneck_forward.9} parent=0 // loop_footer_branch
    %9 = sbr.rel target = $region3
  $region8: #{bottleneck_forward.9} parent=0 // loop_exit
    _

// kernel: bottleneck_forward.11
$region0: #{bottleneck_forward.11}
  #allocation0 [shape = 'u32[]', space=smem, size = 0x4, offset = 0x4, fixed_abs, tag = 'smem constant byte address 0x4 - core index']
  #allocation1 [shape = 'u32[144,128]{1,0:T(1,128)}', space=vmem, size = 0x12000, scoped, tag = 'internal scratch']
  %s0 = inlined_call_operand.vmem [shape: bf16[32,128], index: 0, kind: input, shape index: {}]
  %s1 = inlined_call_operand.vmem [shape: bf16[128,128], index: 1, kind: input, shape index: {}]
  %s2 = inlined_call_operand.vmem [shape: f32[32,128], index: 2, kind: output, shape index: {0}]
  %s3 = inlined_call_operand.vmem [shape: f32[1,2,128], index: 3, kind: output, shape index: {1}]
  %4 = xla_tuple %s2, %s3
  %s5 = sld [smem:[#allocation0]]
  $region26: #{bottleneck_forward.11} parent=0
    _
  %s7 = ssub.s32 1, %s5
  %s8 = scalar_select 0, %s7, %s5
  // Predicated region
  $region2: #{bottleneck_forward.11} parent=0 // pred_check
    _
  $region3: #{bottleneck_forward.11} parent=0 // pred_check_branch
    %10 = sbr.rel (0) target = $region5
  $region4: #{bottleneck_forward.11} parent=0 // pred_region
    _
  $region5: #{bottleneck_forward.11} parent=0 // pred_fallthru
    _
  // Predicated region
  $region6: #{bottleneck_forward.11} parent=0 // pred_check
    _
  $region7: #{bottleneck_forward.11} parent=0 // pred_check_branch
    %12 = sbr.rel (0) target = $region9
  $region8: #{bottleneck_forward.11} parent=0 // pred_region
    _
  $region9: #{bottleneck_forward.11} parent=0 // pred_fallthru
    _
  %v14 = vld [vmem:[%s0] sm:$0xf]
  %v15 = vld [vmem:[%s0 + $0x4] sm:$0xf]
  %v16 = vld [vmem:[%s0 + $0x8] sm:$0xf]
  %v17 = vld [vmem:[%s0 + $0xc] sm:$0xf]
  %v18 = vld [vmem:[%s1] sm:$0xf]
  %v19 = vld [vmem:[%s1 + $0x4] sm:$0xf]
  %v20 = vld [vmem:[%s1 + $0x8] sm:$0xf]
  %v21 = vld [vmem:[%s1 + $0xc] sm:$0xf]
  %v22 = vld [vmem:[%s1 + $0x10] sm:$0xf]
  %v23 = vld [vmem:[%s1 + $0x14] sm:$0xf]
  %v24 = vld [vmem:[%s1 + $0x18] sm:$0xf]
  %v25 = vld [vmem:[%s1 + $0x1c] sm:$0xf]
  %v26 = vld [vmem:[%s1 + $0x20] sm:$0xf]
  %v27 = vld [vmem:[%s1 + $0x24] sm:$0xf]
  %v28 = vld [vmem:[%s1 + $0x28] sm:$0xf]
  %v29 = vld [vmem:[%s1 + $0x2c] sm:$0xf]
  %v30 = vld [vmem:[%s1 + $0x30] sm:$0xf]
  %v31 = vld [vmem:[%s1 + $0x34] sm:$0xf]
  %v32 = vld [vmem:[%s1 + $0x38] sm:$0xf]
  %v33 = vld [vmem:[%s1 + $0x3c] sm:$0xf]
  %v38 = vunpack.c.l.b16 %v14
  %v39 = vunpack.c.l.b16 %v15
  %v40 = vunpack.c.l.b16 %v16
  %v41 = vunpack.c.l.b16 %v17
  %v42 = vpack.c.b16 %v39, %v38
  %v43 = vpack.c.b16 %v41, %v40
  %v62 = vunpack.c.l.b16 %v18
  %v63 = vunpack.c.l.b16 %v19
  %v64 = vunpack.c.l.b16 %v20
  %v65 = vunpack.c.l.b16 %v21
  %v66 = vunpack.c.l.b16 %v22
  %v67 = vunpack.c.l.b16 %v23
  %v68 = vunpack.c.l.b16 %v24
  %v69 = vunpack.c.l.b16 %v25
  %v70 = vunpack.c.l.b16 %v26
  %v71 = vunpack.c.l.b16 %v27
  %v72 = vunpack.c.l.b16 %v28
  %v73 = vunpack.c.l.b16 %v29
  %v74 = vunpack.c.l.b16 %v30
  %v75 = vunpack.c.l.b16 %v31
  %v76 = vunpack.c.l.b16 %v32
  %v77 = vunpack.c.l.b16 %v33
  %v78 = vpack.c.b16 %v63, %v62
  %v79 = vpack.c.b16 %v65, %v64
  %v80 = vpack.c.b16 %v67, %v66
  %v81 = vpack.c.b16 %v69, %v68
  %v82 = vpack.c.b16 %v71, %v70
  %v83 = vpack.c.b16 %v73, %v72
  %v84 = vpack.c.b16 %v75, %v74
  %v85 = vpack.c.b16 %v77, %v76
  %94 = vmatprep.subr.bf16.mxu0 0
  %95 = vmatpush1.bf16.msra.mxu0 %v78
  %96 = vmatprep.subr.bf16.mxu0 0
  %97 = vmatpush1.bf16.msra.mxu0 %v79
  %98 = vmatprep.subr.bf16.mxu0 0
  %99 = vmatpush1.bf16.msra.mxu0 %v80
  %100 = vmatprep.subr.bf16.mxu0 0
  %101 = vmatpush1.bf16.msra.mxu0 %v81
  %102 = vmatprep.subr.bf16.mxu0 0
  %103 = vmatpush1.bf16.msra.mxu0 %v82
  %104 = vmatprep.subr.bf16.mxu0 0
  %105 = vmatpush1.bf16.msra.mxu0 %v83
  %106 = vmatprep.subr.bf16.mxu0 0
  %107 = vmatpush1.bf16.msra.mxu0 %v84
  %108 = vmatprep.subr.bf16.mxu0 0
  %109 = vmatpush1.bf16.msra.mxu0 %v85
  %110 = vmatprep.subr.bf16.mxu0 0
  %111 = vmatpush1.bf16.msra.mxu0 0
  %112 = vmatprep.subr.bf16.mxu0 0
  %113 = vmatpush1.bf16.msra.mxu0 0
  %114 = vmatprep.subr.bf16.mxu0 0
  %115 = vmatpush1.bf16.msra.mxu0 0
  %116 = vmatprep.subr.bf16.mxu0 0
  %117 = vmatpush1.bf16.msra.mxu0 0
  %118 = vmatprep.subr.bf16.mxu0 0
  %119 = vmatpush1.bf16.msra.mxu0 0
  %120 = vmatprep.subr.bf16.mxu0 0
  %121 = vmatpush1.bf16.msra.mxu0 0
  %122 = vmatprep.subr.bf16.mxu0 0
  %123 = vmatpush1.bf16.msra.mxu0 0
  %124 = vmatprep.subr.bf16.mxu0 0
  %125 = vmatpush1.bf16.msra.mxu0 0
  %126 = vmatprep.mubr.bf16.mxu0 0
  %127 = vmatmul.mubr.bf16.gmra.mrb[0].mxu0 %v42
  %v128 = vpop.f32.mrb[0].mxu0
  %v129 = vadd.f32 0.0, %v128
  %v130 = vpop.f32.mrb[0].mxu0
  %v131 = vpop.f32.mrb[0].mxu0
  %v132 = vadd.f32 0.0, %v131
  %v133 = vpop.f32.mrb[0].mxu0
  %134 = vmatprep.mubr.bf16.mxu0 0
  %135 = vmatmul.mubr.bf16.gmra.mrb[0].mxu0 %v43
  %v136 = vpop.f32.mrb[0].mxu0
  %v137 = vadd.f32 0.0, %v136
  %v138 = vpop.f32.mrb[0].mxu0
  %v139 = vpop.f32.mrb[0].mxu0
  %v140 = vadd.f32 0.0, %v139
  %v141 = vpop.f32.mrb[0].mxu0
  %142 = vdwg.mxu0
  %143 = vst [vmem:[%s2] sm:$0xff] %v129
  %144 = vst [vmem:[%s2 + $0x8] sm:$0xff] %v132
  %145 = vst [vmem:[%s2 + $0x10] sm:$0xff] %v137
  %146 = vst [vmem:[%s2 + $0x18] sm:$0xff] %v140
  %v147 = vadd.f32 %v129, %v132
  %v148 = vadd.f32 %v147, %v137
  %v149 = vadd.f32 %v148, %v140
  %v150 = vrot.slane %v149, 4
  %v151 = vadd.f32 %v149, %v150
  %v152 = vrot.slane %v151, 2
  %v153 = vadd.f32 %v151, %v152
  %v154 = vrot.slane %v153, 1
  %v155 = vadd.f32 %v153, %v154
  %156 = vst [vmem:[%s3] sm:$0x1] %v155
  %v157 = vmul.f32 %v129, %v129
  %v158 = vmul.f32 %v132, %v132
  %v159 = vmul.f32 %v137, %v137
  %v160 = vmul.f32 %v140, %v140
  %v161 = vadd.f32 %v157, %v158
  %v162 = vadd.f32 %v161, %v159
  %v163 = vadd.f32 %v162, %v160
  %v164 = vrot.slane %v163, 4
  %v165 = vadd.f32 %v163, %v164
  %v166 = vrot.slane %v165, 2
  %v167 = vadd.f32 %v165, %v166
  %v168 = vrot.slane %v167, 1
  %v169 = vadd.f32 %v167, %v168
  %170 = vst [vmem:[%s3 + $0x1] sm:$0x1] %v169
  // Predicated region
  $region10: #{bottleneck_forward.11} parent=0 // pred_check
    _
  $region11: #{bottleneck_forward.11} parent=0 // pred_check_branch
    %172 = sbr.rel (0) target = $region13
  $region12: #{bottleneck_forward.11} parent=0 // pred_region
    _
  $region13: #{bottleneck_forward.11} parent=0 // pred_fallthru
    _
  // Predicated region
  $region14: #{bottleneck_forward.11} parent=0 // pred_check
    _
  $region15: #{bottleneck_forward.11} parent=0 // pred_check_branch
    %174 = sbr.rel (0) target = $region17
  $region16: #{bottleneck_forward.11} parent=0 // pred_region
    _
  $region17: #{bottleneck_forward.11} parent=0 // pred_fallthru
    _
  // Predicated region
  $region18: #{bottleneck_forward.11} parent=0 // pred_check
    _
  $region19: #{bottleneck_forward.11} parent=0 // pred_check_branch
    %176 = sbr.rel (0) target = $region21
  $region20: #{bottleneck_forward.11} parent=0 // pred_region
    _
  $region21: #{bottleneck_forward.11} parent=0 // pred_fallthru
    _
  // Predicated region
  $region22: #{bottleneck_forward.11} parent=0 // pred_check
    _
  $region23: #{bottleneck_forward.11} parent=0 // pred_check_branch
    %178 = sbr.rel (0) target = $region25
  $region24: #{bottleneck_forward.11} parent=0 // pred_region
    _
  $region25: #{bottleneck_forward.11} parent=0 // pred_fallthru
    _

// kernel: bottleneck_forward.13
$region0: #{bottleneck_forward.13}
  #allocation0 [shape = 'u32[]', space=smem, size = 0x4, offset = 0x4, fixed_abs, tag = 'smem constant byte address 0x4 - core index']
  #allocation1 [shape = 'u32[144,128]{1,0:T(1,128)}', space=vmem, size = 0x12000, scoped, tag = 'internal scratch']
  %s0 = inlined_call_operand.vmem [shape: f32[32,128], index: 0, kind: input, shape index: {}]
  %s1 = inlined_call_operand.vmem [shape: f32[1,128], index: 1, kind: input, shape index: {}]
  %s2 = inlined_call_operand.vmem [shape: f32[1,128], index: 2, kind: input, shape index: {}]
  %s3 = inlined_call_operand.vmem [shape: f32[32,128], index: 3, kind: input, shape index: {}]
  %s4 = inlined_call_operand.vmem [shape: f32[1,128], index: 4, kind: input, shape index: {}]
  %s5 = inlined_call_operand.vmem [shape: f32[1,128], index: 5, kind: input, shape index: {}]
  %s6 = inlined_call_operand.hbm [shape: f32[32,128], index: 6, kind: output, shape index: {}]
  %s7 = sld [smem:[#allocation0]]
  $region34: #{bottleneck_forward.13} parent=0
    _
  %s9 = ssub.s32 1, %s7
  %s10 = scalar_select 0, %s9, %s7
  $region1: #{bottleneck_forward.13} parent=0
    #allocation2 [shape = 'u8[16384]{0}', space=vmem, size = 0x4000, scoped, tag = 'output window, operand 0, single buffered']
    #allocation3 [shape = 's32[1]{0}', space=sflag, size = 0x4, scoped, tag = 'scoped memory for bottleneck_forward.13']
    %11 = vsyncpa [#allocation3], 0
    // Predicated region
    $region2: #{bottleneck_forward.13} parent=1 // pred_check
      _
    $region3: #{bottleneck_forward.13} parent=1 // pred_check_branch
      %13 = sbr.rel (0) target = $region5
    $region4: #{bottleneck_forward.13} parent=1 // pred_region
      _
    $region5: #{bottleneck_forward.13} parent=1 // pred_fallthru
      _
    // Predicated region
    $region6: #{bottleneck_forward.13} parent=1 // pred_check
      _
    $region7: #{bottleneck_forward.13} parent=1 // pred_check_branch
      %15 = sbr.rel (0) target = $region9
    $region8: #{bottleneck_forward.13} parent=1 // pred_region
      _
    $region9: #{bottleneck_forward.13} parent=1 // pred_fallthru
      _
    // Predicated region
    $region10: #{bottleneck_forward.13} parent=1 // pred_check
      _
    $region11: #{bottleneck_forward.13} parent=1 // pred_check_branch
      %17 = sbr.rel (0) target = $region13
    $region12: #{bottleneck_forward.13} parent=1 // pred_region
      _
    $region13: #{bottleneck_forward.13} parent=1 // pred_fallthru
      _
    // Predicated region
    $region14: #{bottleneck_forward.13} parent=1 // pred_check
      _
    $region15: #{bottleneck_forward.13} parent=1 // pred_check_branch
      %19 = sbr.rel (0) target = $region17
    $region16: #{bottleneck_forward.13} parent=1 // pred_region
      _
    $region17: #{bottleneck_forward.13} parent=1 // pred_fallthru
      _
    // Predicated region
    $region18: #{bottleneck_forward.13} parent=1 // pred_check
      _
    $region19: #{bottleneck_forward.13} parent=1 // pred_check_branch
      %21 = sbr.rel (0) target = $region21
    $region20: #{bottleneck_forward.13} parent=1 // pred_region
      _
    $region21: #{bottleneck_forward.13} parent=1 // pred_fallthru
      _
    // Predicated region
    $region22: #{bottleneck_forward.13} parent=1 // pred_check
      _
    $region23: #{bottleneck_forward.13} parent=1 // pred_check_branch
      %23 = sbr.rel (0) target = $region25
    $region24: #{bottleneck_forward.13} parent=1 // pred_region
      _
    $region25: #{bottleneck_forward.13} parent=1 // pred_fallthru
      _
    %v24 = vld [vmem:[%s0] sm:$0xff]
    %v25 = vld [vmem:[%s0 + $0x8] sm:$0xff]
    %v26 = vld [vmem:[%s0 + $0x10] sm:$0xff]
    %v27 = vld [vmem:[%s0 + $0x18] sm:$0xff]
    %v28 = vld [vmem:[%s1] sm:$0x1]
    %v30 = vlaneseq
    %v31 = vshrl.u32 %v30, 7
    %v32 = vsub.s32 0, %v31
    %v33 = vrot.slane %v28, %v32
    %v35 = vmul.f32 %v24, %v33
    %v36 = vmul.f32 %v25, %v33
    %v37 = vmul.f32 %v26, %v33
    %v38 = vmul.f32 %v27, %v33
    %v39 = vld [vmem:[%s2] sm:$0x1]
    %v41 = vlaneseq
    %v42 = vshrl.u32 %v41, 7
    %v43 = vsub.s32 0, %v42
    %v44 = vrot.slane %v39, %v43
    %v46 = vadd.f32 %v35, %v44
    %v47 = vadd.f32 %v36, %v44
    %v48 = vadd.f32 %v37, %v44
    %v49 = vadd.f32 %v38, %v44
    %v50 = vld [vmem:[%s3] sm:$0xff]
    %v51 = vld [vmem:[%s3 + $0x8] sm:$0xff]
    %v52 = vld [vmem:[%s3 + $0x10] sm:$0xff]
    %v53 = vld [vmem:[%s3 + $0x18] sm:$0xff]
    %v54 = vld [vmem:[%s4] sm:$0x1]
    %v56 = vlaneseq
    %v57 = vshrl.u32 %v56, 7
    %v58 = vsub.s32 0, %v57
    %v59 = vrot.slane %v54, %v58
    %v61 = vmul.f32 %v50, %v59
    %v62 = vmul.f32 %v51, %v59
    %v63 = vmul.f32 %v52, %v59
    %v64 = vmul.f32 %v53, %v59
    %v65 = vld [vmem:[%s5] sm:$0x1]
    %v67 = vlaneseq
    %v68 = vshrl.u32 %v67, 7
    %v69 = vsub.s32 0, %v68
    %v70 = vrot.slane %v65, %v69
    %v72 = vadd.f32 %v61, %v70
    %v73 = vadd.f32 %v62, %v70
    %v74 = vadd.f32 %v63, %v70
    %v75 = vadd.f32 %v64, %v70
    %v76 = vadd.f32 %v46, %v72
    %v77 = vadd.f32 %v47, %v73
    %v78 = vadd.f32 %v48, %v74
    %v79 = vadd.f32 %v49, %v75
    %v80 = vmax.f32 %v76, 0.0
    %v81 = vmax.f32 %v77, 0.0
    %v82 = vmax.f32 %v78, 0.0
    %v83 = vmax.f32 %v79, 0.0
    %84 = vst [vmem:[#allocation2] sm:$0xff] %v80
    %85 = vst [vmem:[#allocation2 + $0x8] sm:$0xff] %v81
    %86 = vst [vmem:[#allocation2 + $0x10] sm:$0xff] %v82
    %87 = vst [vmem:[#allocation2 + $0x18] sm:$0xff] %v83
    // Predicated region
    $region26: #{bottleneck_forward.13} parent=1 // pred_check
      _
    $region27: #{bottleneck_forward.13} parent=1 // pred_check_branch
      %89 = sbr.rel (0) target = $region29
    $region28: #{bottleneck_forward.13} parent=1 // pred_region
      %s91 = ssub.s32 512, 512
      %92 = vsyncadd [#allocation3], %s91
      %s93 = sshll.u32 [#allocation2], 4
      %s94 = int_to_ptr.vmem [resolvable:$true] %s93
      %99 = dma.vmem_to_hbm [thread:$0]  %s94, 512, %s6, [#allocation3], 128, 128, 8
    $region29: #{bottleneck_forward.13} parent=1 // pred_fallthru
      _
    // Predicated region
    $region30: #{bottleneck_forward.13} parent=1 // pred_check
      _
    $region31: #{bottleneck_forward.13} parent=1 // pred_check_branch
      %101 = sbr.rel (0) target = $region33
    $region32: #{bottleneck_forward.13} parent=1 // pred_region
      %102 = dma.done [#allocation3], 512
    $region33: #{bottleneck_forward.13} parent=1 // pred_fallthru
      _
    %103 = vsyncpa [#allocation3], 1

</llo_original>
